<compile_context>
chip_gen: v5e
topology: v5e:2x2
jax: 0.10.0
libtpu: 0.0.40
codegen_flags: <defaults>
</compile_context>

<pallas_src>
import jax
import jax.numpy as jnp
from jax.experimental import pallas as pl
from jax.experimental.pallas import tpu as pltpu

INPUT_SIZE = 15
OUTPUT_SIZE = 1
GROWTH_RATE = 10
NUM_LAYERS = 5

PACK_WIDTH = 128          # >= INPUT_SIZE + NUM_LAYERS * GROWTH_RATE = 65
B_TILE = 256              # batch tile (multiple of 128)


def densemlp_kernel(x_ref, w_ref, b_ref, wf_ref, bf_ref, out_ref, packed_ref):
    """One batch tile: x (B_TILE, 15) -> lane-dense out row (1, B_TILE)."""
    # Lane-packed feature buffer: [x | h0 | h1 | h2 | h3 | h4 | zero pad].
    packed_ref[...] = jnp.zeros_like(packed_ref)
    packed_ref[:, 0:INPUT_SIZE] = x_ref[...]

    b_all = b_ref[...]                                     # (NUM_LAYERS, G)
    for k in range(NUM_LAYERS):
        w = w_ref[k]                                       # (128, G), rows >= 15+10k are zero
        acc = jnp.dot(packed_ref[...], w,
                      preferred_element_type=jnp.float32)  # (B_TILE, G), single K=128 matmul
        h = jnp.maximum(acc + b_all[k:k + 1, :], 0.0)      # ReLU
        off = INPUT_SIZE + k * GROWTH_RATE
        packed_ref[:, off:off + GROWTH_RATE] = h

    # Final 1-wide projection, emitted as a lane-dense (1, B_TILE) row.
    out_row = jnp.dot(wf_ref[...], packed_ref[...].T,
                      preferred_element_type=jnp.float32)  # (1, B_TILE)
    out_ref[...] = out_row + bf_ref[...]                   # bf (1,1) broadcasts


def init_params(key):
    """PyTorch-style nn.Linear init (uniform +-1/sqrt(fan_in)), deterministic."""
    params = []
    current = INPUT_SIZE
    for _ in range(NUM_LAYERS):
        key, kw, kb = jax.random.split(key, 3)
        bound = 1.0 / jnp.sqrt(current)
        w = jax.random.uniform(kw, (GROWTH_RATE, current), jnp.float32, -bound, bound)
        b = jax.random.uniform(kb, (GROWTH_RATE,), jnp.float32, -bound, bound)
        params.append((w, b))
        current += GROWTH_RATE
    key, kw, kb = jax.random.split(key, 3)
    bound = 1.0 / jnp.sqrt(current)
    wf = jax.random.uniform(kw, (OUTPUT_SIZE, current), jnp.float32, -bound, bound)
    bf = jax.random.uniform(kb, (OUTPUT_SIZE,), jnp.float32, -bound, bound)
    return params, (wf, bf)


def prepare_params(params, final_params):
    """Hoist transposes / zero-padding out of the call path (done once)."""
    w_pads, b_rows = [], []
    for (w, b) in params:                        # w: (G, in_k), b: (G,)
        wt = jnp.zeros((PACK_WIDTH, GROWTH_RATE), jnp.float32)
        wt = wt.at[:w.shape[1], :].set(w.T)      # rows beyond in_k stay exactly zero
        w_pads.append(wt)
        b_rows.append(b.astype(jnp.float32))
    w_all = jnp.stack(w_pads)                    # (NUM_LAYERS, 128, G)
    b_all = jnp.stack(b_rows)                    # (NUM_LAYERS, G)
    wf, bf = final_params                        # (1, 65), (1,)
    wf_row = jnp.zeros((OUTPUT_SIZE, PACK_WIDTH), jnp.float32)
    wf_row = wf_row.at[:, :wf.shape[1]].set(wf)  # lanes >= 65 stay zero
    bf2 = bf.reshape(1, 1).astype(jnp.float32)
    return w_all, b_all, wf_row, bf2


def densemlp_pallas(x, prepared, *, b_tile=B_TILE):
    w_all, b_all, wf_row, bf = prepared
    B = x.shape[0]
    n_tiles = pl.cdiv(B, b_tile)
    b_pad = n_tiles * b_tile
    if b_pad != B:
        x = jnp.pad(x, ((0, b_pad - B), (0, 0)))

    out = pl.pallas_call(
        densemlp_kernel,
        out_shape=jax.ShapeDtypeStruct((1, b_pad), jnp.float32),
        grid_spec=pltpu.PrefetchScalarGridSpec(
            num_scalar_prefetch=0,
            grid=(n_tiles,),
            in_specs=[
                pl.BlockSpec((b_tile, INPUT_SIZE), lambda i: (i, 0)),       # x: streamed
                pl.BlockSpec((NUM_LAYERS, PACK_WIDTH, GROWTH_RATE),
                             lambda i: (0, 0, 0)),                          # weights: resident
                pl.BlockSpec((NUM_LAYERS, GROWTH_RATE), lambda i: (0, 0)),  # biases: resident
                pl.BlockSpec((OUTPUT_SIZE, PACK_WIDTH), lambda i: (0, 0)),  # final weight row
                pl.BlockSpec((1, 1), lambda i: (0, 0)),                     # final bias
            ],
            out_specs=pl.BlockSpec((1, b_tile), lambda i: (0, i)),          # lane-dense out
            scratch_shapes=[pltpu.VMEM((b_tile, PACK_WIDTH), jnp.float32)],
        ),
        compiler_params=pltpu.CompilerParams(
            dimension_semantics=("parallel",)),
    )(x, w_all, b_all, wf_row, bf)

    return out.reshape(b_pad, OUTPUT_SIZE)[:B]


def densemlp_ref(x, params, final_params):
    """Pure-JAX reference mirroring the PyTorch module exactly."""
    feats = [x]
    for (w, b) in params:
        inp = jnp.concatenate(feats, axis=1)
        feats.append(jnp.maximum(inp @ w.T + b, 0.0))
    wf, bf = final_params
    return jnp.concatenate(feats, axis=1) @ wf.T + bf


if __name__ == "__main__":
    key = jax.random.PRNGKey(0)
    key, kx = jax.random.split(key)

    B = 512  # small demo batch; exercises 2 grid steps at B_TILE=256
    x = jax.random.normal(kx, (B, INPUT_SIZE), jnp.float32)

    params, final_params = init_params(key)
    prepared = prepare_params(params, final_params)

    out = densemlp_pallas(x, prepared)
    out = jax.block_until_ready(out)

    ref = densemlp_ref(x, params, final_params)
    assert out.shape == (B, OUTPUT_SIZE)
    assert jnp.allclose(out, ref, atol=1e-4, rtol=1e-4), (out, ref)

    print("KERNEL_OK")
</pallas_src>

<mosaic_0001>
module attributes {stable_mosaic.version = 11 : i64} {
  func.func @densemlp_kernel(%arg0: i32, %arg1: memref<256x15xf32, #tpu.memory_space<vmem>>, %arg2: memref<5x128x10xf32, #tpu.memory_space<vmem>>, %arg3: memref<5x10xf32, #tpu.memory_space<vmem>>, %arg4: memref<1x128xf32, #tpu.memory_space<vmem>>, %arg5: memref<1x1xf32, #tpu.memory_space<vmem>>, %arg6: memref<1x256xf32, #tpu.memory_space<vmem>>, %arg7: memref<256x128xf32, #tpu.memory_space<vmem>>) attributes {dimension_semantics = [#tpu.dimension_semantics<parallel>], iteration_bounds = array<i64: 2>, scalar_prefetch = 0 : i64, scratch_operands = 1 : i64, tpu.core_type = #tpu.core_type<tc>, window_params = [{transform_indices = @transform_0, window_bounds = array<i64: 256, 15>}, {pipeline_mode = #tpu.pipeline_mode<synchronous>, transform_indices = @transform_1, window_bounds = array<i64: 5, 128, 10>}, {pipeline_mode = #tpu.pipeline_mode<synchronous>, transform_indices = @transform_2, window_bounds = array<i64: 5, 10>}, {pipeline_mode = #tpu.pipeline_mode<synchronous>, transform_indices = @transform_3, window_bounds = array<i64: 1, 128>}, {pipeline_mode = #tpu.pipeline_mode<synchronous>, transform_indices = @transform_4, window_bounds = array<i64: 1, 1>}, {transform_indices = @transform_5, window_bounds = array<i64: 1, 256>}]} {
    %cst = arith.constant 0.000000e+00 : f32
    %0 = vector.broadcast %cst : f32 to vector<256x128xf32>
    %c0 = arith.constant 0 : index
    %c0_0 = arith.constant 0 : index
    %1 = vector.load %arg7[%c0, %c0_0] : memref<256x128xf32, #tpu.memory_space<vmem>>, vector<256x128xf32>
    tpu.vector_store %arg7[%c0, %c0_0], %0 {strides = array<i32>} : memref<256x128xf32, #tpu.memory_space<vmem>>, vector<256x128xf32>,
    %c0_1 = arith.constant 0 : index
    %c0_2 = arith.constant 0 : index
    %2 = vector.load %arg1[%c0_1, %c0_2] : memref<256x15xf32, #tpu.memory_space<vmem>>, vector<256x15xf32>
    %c0_3 = arith.constant 0 : index
    %c0_4 = arith.constant 0 : index
    %3 = vector.load %arg7[%c0_3, %c0_4] : memref<256x128xf32, #tpu.memory_space<vmem>>, vector<256x15xf32>
    tpu.vector_store %arg7[%c0_3, %c0_4], %2 {strides = array<i32>} : memref<256x128xf32, #tpu.memory_space<vmem>>, vector<256x15xf32>,
    %c0_5 = arith.constant 0 : index
    %c0_6 = arith.constant 0 : index
    %4 = vector.load %arg3[%c0_5, %c0_6] : memref<5x10xf32, #tpu.memory_space<vmem>>, vector<5x10xf32>
    %c0_7 = arith.constant 0 : index
    %c0_8 = arith.constant 0 : index
    %c0_9 = arith.constant 0 : index
    %5 = vector.load %arg2[%c0_7, %c0_8, %c0_9] : memref<5x128x10xf32, #tpu.memory_space<vmem>>, vector<1x128x10xf32>
    %6 = vector.shape_cast %5 : vector<1x128x10xf32> to vector<128x10xf32>
    %c0_10 = arith.constant 0 : index
    %c0_11 = arith.constant 0 : index
    %7 = vector.load %arg7[%c0_10, %c0_11] : memref<256x128xf32, #tpu.memory_space<vmem>>, vector<256x128xf32>
    %cst_12 = arith.constant dense<0.000000e+00> : vector<256x10xf32>
    %8 = tpu.matmul %7, %6, %cst_12 {dimension_numbers = #tpu.dot_dimension_numbers<[1], [0], [0], [1], [0, 0, 1, 1], [], []>} : vector<256x128xf32>, vector<128x10xf32>, vector<256x10xf32> -> vector<256x10xf32>
    %9 = vector.extract_strided_slice %4 {offsets = [0, 0], sizes = [1, 10], strides = [1, 1]} : vector<5x10xf32> to vector<1x10xf32>
    %10 = vector.broadcast %9 : vector<1x10xf32> to vector<256x10xf32>
    %11 = arith.addf %8, %10 : vector<256x10xf32>
    %cst_13 = arith.constant 0.000000e+00 : f32
    %12 = vector.broadcast %cst_13 : f32 to vector<256x10xf32>
    %13 = arith.maximumf %11, %12 : vector<256x10xf32>
    %c0_14 = arith.constant 0 : index
    %c15 = arith.constant 15 : index
    %14 = vector.load %arg7[%c0_14, %c15] : memref<256x128xf32, #tpu.memory_space<vmem>>, vector<256x10xf32>
    tpu.vector_store %arg7[%c0_14, %c15], %13 {strides = array<i32>} : memref<256x128xf32, #tpu.memory_space<vmem>>, vector<256x10xf32>,
    %c1 = arith.constant 1 : index
    %c0_15 = arith.constant 0 : index
    %c0_16 = arith.constant 0 : index
    %15 = vector.load %arg2[%c1, %c0_15, %c0_16] : memref<5x128x10xf32, #tpu.memory_space<vmem>>, vector<1x128x10xf32>
    %16 = vector.shape_cast %15 : vector<1x128x10xf32> to vector<128x10xf32>
    %c0_17 = arith.constant 0 : index
    %c0_18 = arith.constant 0 : index
    %17 = vector.load %arg7[%c0_17, %c0_18] : memref<256x128xf32, #tpu.memory_space<vmem>>, vector<256x128xf32>
    %cst_19 = arith.constant dense<0.000000e+00> : vector<256x10xf32>
    %18 = tpu.matmul %17, %16, %cst_19 {dimension_numbers = #tpu.dot_dimension_numbers<[1], [0], [0], [1], [0, 0, 1, 1], [], []>} : vector<256x128xf32>, vector<128x10xf32>, vector<256x10xf32> -> vector<256x10xf32>
    %19 = vector.extract_strided_slice %4 {offsets = [1, 0], sizes = [1, 10], strides = [1, 1]} : vector<5x10xf32> to vector<1x10xf32>
    %20 = vector.broadcast %19 : vector<1x10xf32> to vector<256x10xf32>
    %21 = arith.addf %18, %20 : vector<256x10xf32>
    %cst_20 = arith.constant 0.000000e+00 : f32
    %22 = vector.broadcast %cst_20 : f32 to vector<256x10xf32>
    %23 = arith.maximumf %21, %22 : vector<256x10xf32>
    %c0_21 = arith.constant 0 : index
    %c25 = arith.constant 25 : index
    %24 = vector.load %arg7[%c0_21, %c25] : memref<256x128xf32, #tpu.memory_space<vmem>>, vector<256x10xf32>
    tpu.vector_store %arg7[%c0_21, %c25], %23 {strides = array<i32>} : memref<256x128xf32, #tpu.memory_space<vmem>>, vector<256x10xf32>,
    %c2 = arith.constant 2 : index
    %c0_22 = arith.constant 0 : index
    %c0_23 = arith.constant 0 : index
    %25 = vector.load %arg2[%c2, %c0_22, %c0_23] : memref<5x128x10xf32, #tpu.memory_space<vmem>>, vector<1x128x10xf32>
    %26 = vector.shape_cast %25 : vector<1x128x10xf32> to vector<128x10xf32>
    %c0_24 = arith.constant 0 : index
    %c0_25 = arith.constant 0 : index
    %27 = vector.load %arg7[%c0_24, %c0_25] : memref<256x128xf32, #tpu.memory_space<vmem>>, vector<256x128xf32>
    %cst_26 = arith.constant dense<0.000000e+00> : vector<256x10xf32>
    %28 = tpu.matmul %27, %26, %cst_26 {dimension_numbers = #tpu.dot_dimension_numbers<[1], [0], [0], [1], [0, 0, 1, 1], [], []>} : vector<256x128xf32>, vector<128x10xf32>, vector<256x10xf32> -> vector<256x10xf32>
    %29 = vector.extract_strided_slice %4 {offsets = [2, 0], sizes = [1, 10], strides = [1, 1]} : vector<5x10xf32> to vector<1x10xf32>
    %30 = vector.broadcast %29 : vector<1x10xf32> to vector<256x10xf32>
    %31 = arith.addf %28, %30 : vector<256x10xf32>
    %cst_27 = arith.constant 0.000000e+00 : f32
    %32 = vector.broadcast %cst_27 : f32 to vector<256x10xf32>
    %33 = arith.maximumf %31, %32 : vector<256x10xf32>
    %c0_28 = arith.constant 0 : index
    %c35 = arith.constant 35 : index
    %34 = vector.load %arg7[%c0_28, %c35] : memref<256x128xf32, #tpu.memory_space<vmem>>, vector<256x10xf32>
    tpu.vector_store %arg7[%c0_28, %c35], %33 {strides = array<i32>} : memref<256x128xf32, #tpu.memory_space<vmem>>, vector<256x10xf32>,
    %c3 = arith.constant 3 : index
    %c0_29 = arith.constant 0 : index
    %c0_30 = arith.constant 0 : index
    %35 = vector.load %arg2[%c3, %c0_29, %c0_30] : memref<5x128x10xf32, #tpu.memory_space<vmem>>, vector<1x128x10xf32>
    %36 = vector.shape_cast %35 : vector<1x128x10xf32> to vector<128x10xf32>
    %c0_31 = arith.constant 0 : index
    %c0_32 = arith.constant 0 : index
    %37 = vector.load %arg7[%c0_31, %c0_32] : memref<256x128xf32, #tpu.memory_space<vmem>>, vector<256x128xf32>
    %cst_33 = arith.constant dense<0.000000e+00> : vector<256x10xf32>
    %38 = tpu.matmul %37, %36, %cst_33 {dimension_numbers = #tpu.dot_dimension_numbers<[1], [0], [0], [1], [0, 0, 1, 1], [], []>} : vector<256x128xf32>, vector<128x10xf32>, vector<256x10xf32> -> vector<256x10xf32>
    %39 = vector.extract_strided_slice %4 {offsets = [3, 0], sizes = [1, 10], strides = [1, 1]} : vector<5x10xf32> to vector<1x10xf32>
    %40 = vector.broadcast %39 : vector<1x10xf32> to vector<256x10xf32>
    %41 = arith.addf %38, %40 : vector<256x10xf32>
    %cst_34 = arith.constant 0.000000e+00 : f32
    %42 = vector.broadcast %cst_34 : f32 to vector<256x10xf32>
    %43 = arith.maximumf %41, %42 : vector<256x10xf32>
    %c0_35 = arith.constant 0 : index
    %c45 = arith.constant 45 : index
    %44 = vector.load %arg7[%c0_35, %c45] : memref<256x128xf32, #tpu.memory_space<vmem>>, vector<256x10xf32>
    tpu.vector_store %arg7[%c0_35, %c45], %43 {strides = array<i32>} : memref<256x128xf32, #tpu.memory_space<vmem>>, vector<256x10xf32>,
    %c4 = arith.constant 4 : index
    %c0_36 = arith.constant 0 : index
    %c0_37 = arith.constant 0 : index
    %45 = vector.load %arg2[%c4, %c0_36, %c0_37] : memref<5x128x10xf32, #tpu.memory_space<vmem>>, vector<1x128x10xf32>
    %46 = vector.shape_cast %45 : vector<1x128x10xf32> to vector<128x10xf32>
    %c0_38 = arith.constant 0 : index
    %c0_39 = arith.constant 0 : index
    %47 = vector.load %arg7[%c0_38, %c0_39] : memref<256x128xf32, #tpu.memory_space<vmem>>, vector<256x128xf32>
    %cst_40 = arith.constant dense<0.000000e+00> : vector<256x10xf32>
    %48 = tpu.matmul %47, %46, %cst_40 {dimension_numbers = #tpu.dot_dimension_numbers<[1], [0], [0], [1], [0, 0, 1, 1], [], []>} : vector<256x128xf32>, vector<128x10xf32>, vector<256x10xf32> -> vector<256x10xf32>
    %49 = vector.extract_strided_slice %4 {offsets = [4, 0], sizes = [1, 10], strides = [1, 1]} : vector<5x10xf32> to vector<1x10xf32>
    %50 = vector.broadcast %49 : vector<1x10xf32> to vector<256x10xf32>
    %51 = arith.addf %48, %50 : vector<256x10xf32>
    %cst_41 = arith.constant 0.000000e+00 : f32
    %52 = vector.broadcast %cst_41 : f32 to vector<256x10xf32>
    %53 = arith.maximumf %51, %52 : vector<256x10xf32>
    %c0_42 = arith.constant 0 : index
    %c55 = arith.constant 55 : index
    %54 = vector.load %arg7[%c0_42, %c55] : memref<256x128xf32, #tpu.memory_space<vmem>>, vector<256x10xf32>
    tpu.vector_store %arg7[%c0_42, %c55], %53 {strides = array<i32>} : memref<256x128xf32, #tpu.memory_space<vmem>>, vector<256x10xf32>,
    %c0_43 = arith.constant 0 : index
    %c0_44 = arith.constant 0 : index
    %55 = vector.load %arg4[%c0_43, %c0_44] : memref<1x128xf32, #tpu.memory_space<vmem>>, vector<1x128xf32>
    %c0_45 = arith.constant 0 : index
    %c0_46 = arith.constant 0 : index
    %56 = vector.load %arg7[%c0_45, %c0_46] : memref<256x128xf32, #tpu.memory_space<vmem>>, vector<256x128xf32>
    %57 = tpu.transpose %56, [1, 0] : vector<256x128xf32> -> vector<128x256xf32>
    %cst_47 = arith.constant dense<0.000000e+00> : vector<1x256xf32>
    %58 = tpu.matmul %55, %57, %cst_47 {dimension_numbers = #tpu.dot_dimension_numbers<[1], [0], [0], [1], [0, 0, 1, 1], [], []>} : vector<1x128xf32>, vector<128x256xf32>, vector<1x256xf32> -> vector<1x256xf32>
    %c0_48 = arith.constant 0 : index
    %c0_49 = arith.constant 0 : index
    %59 = vector.load %arg5[%c0_48, %c0_49] : memref<1x1xf32, #tpu.memory_space<vmem>>, vector<1x1xf32>
    %60 = vector.broadcast %59 : vector<1x1xf32> to vector<1x256xf32>
    %61 = arith.addf %58, %60 : vector<1x256xf32>
    %c0_50 = arith.constant 0 : index
    %c0_51 = arith.constant 0 : index
    %62 = vector.load %arg6[%c0_50, %c0_51] : memref<1x256xf32, #tpu.memory_space<vmem>>, vector<1x256xf32>
    tpu.vector_store %arg6[%c0_50, %c0_51], %61 {strides = array<i32>} : memref<1x256xf32, #tpu.memory_space<vmem>>, vector<1x256xf32>,
    return
  }
  func.func @transform_0(%arg0: i32) -> (i32, i32) {
    %c0_i32 = arith.constant 0 : i32
    %c0_i32_0 = arith.constant 0 : i32
    return %arg0, %c0_i32 : i32, i32
  }
  func.func @transform_1(%arg0: i32) -> (i32, i32, i32) {
    %c0_i32 = arith.constant 0 : i32
    %c0_i32_0 = arith.constant 0 : i32
    %c0_i32_1 = arith.constant 0 : i32
    %c0_i32_2 = arith.constant 0 : i32
    return %c0_i32, %c0_i32_0, %c0_i32_1 : i32, i32, i32
  }
  func.func @transform_2(%arg0: i32) -> (i32, i32) {
    %c0_i32 = arith.constant 0 : i32
    %c0_i32_0 = arith.constant 0 : i32
    %c0_i32_1 = arith.constant 0 : i32
    return %c0_i32, %c0_i32_0 : i32, i32
  }
  func.func @transform_3(%arg0: i32) -> (i32, i32) {
    %c0_i32 = arith.constant 0 : i32
    %c0_i32_0 = arith.constant 0 : i32
    %c0_i32_1 = arith.constant 0 : i32
    return %c0_i32, %c0_i32_0 : i32, i32
  }
  func.func @transform_4(%arg0: i32) -> (i32, i32) {
    %c0_i32 = arith.constant 0 : i32
    %c0_i32_0 = arith.constant 0 : i32
    %c0_i32_1 = arith.constant 0 : i32
    return %c0_i32, %c0_i32_0 : i32, i32
  }
  func.func @transform_5(%arg0: i32) -> (i32, i32) {
    %c0_i32 = arith.constant 0 : i32
    %c0_i32_0 = arith.constant 0 : i32
    return %c0_i32, %arg0 : i32, i32
  }
}

</mosaic_0001>

<llo_original>
// kernel: tpu_custom_call.1
$region0: #{tpu_custom_call.1}
  #allocation0 [shape = 'u32[]', space=smem, size = 0x4, offset = 0x4, fixed_abs, tag = 'smem constant byte address 0x4 - core index']
  #allocation1 [shape = 'u32[72,128]{1,0:T(1,128)}', space=vmem, size = 0x9000, scoped, tag = 'internal scratch']
  #allocation2 [shape = 'f32[256,128]{1,0:T(8,128)}', space=vmem, size = 0x20000, scoped, tag = 'scratch operand']
  #allocation3 [shape = 'f32[1,1]{1,0:T(1,128)S(1)}', space=vmem, size = 0x200, scoped, tag = 'scoped memory for tpu_custom_call.1']
  %s0 = inlined_call_operand.vmem [shape: f32[512,15], index: 0, kind: input, shape index: {}]
  %s1 = inlined_call_operand.vmem [shape: f32[5,128,10], index: 1, kind: input, shape index: {}]
  %s2 = inlined_call_operand.vmem [shape: f32[5,10], index: 2, kind: input, shape index: {}]
  %s3 = inlined_call_operand.vmem [shape: f32[1,128], index: 3, kind: input, shape index: {}]
  %s4 = inlined_call_operand.<no memory space> [shape: f32[1,1], index: 4, kind: input, shape index: {}]
  %s5 = inlined_call_operand.hbm [shape: f32[1,512], index: 5, kind: output, shape index: {}]
  %s6 = sld [smem:[#allocation0]]
  $region53: #{tpu_custom_call.1} parent=0
    _
  %s8 = ssub.s32 1, %s6
  %s9 = scalar_select 0, %s8, %s6
  %v10 = vstv %s4
  %11 = vst [vmem:[#allocation3] sm:$0x1] %v10
  $region1: #{tpu_custom_call.1} parent=0
    #allocation4 [shape = 'u8[2048]{0}', space=vmem, size = 0x800, scoped, tag = 'output window, operand 0']
    #allocation5 [shape = 's32[2]{0}', space=sflag, size = 0x8, scoped, tag = 'scoped memory for tpu_custom_call.1']
    %12 = vsyncpa [#allocation5], 0
    %s13 = scalar_lea.sflag [#allocation5], 1
    %14 = vsyncpa %s13, 0
    loop: start=0, step=1, limit=4
    $region2: #{tpu_custom_call.1} parent=1 // loop_pre_header
      _
    $region3: #{tpu_custom_call.1} parent=1 // loop_header
      %s16 = sphi 0, %s20
      %p17 = scmp.ge.s32.totalorder %s16, 4
      %s26 = sphi 0, %s28
      %s29 = sphi 0, %s26
      %s30 = sphi 0, %s29
      %s46 = sphi 0, %s30
      %s50 = sphi 0, %s50
      %s52 = sphi 0, %s50
      %s53 = sphi 0, %s52
      %s67 = sphi 0, %s53
      %s71 = sphi 0, %s71
      %s73 = sphi 0, %s71
      %s74 = sphi 0, %s73
      %s88 = sphi 0, %s74
      %s92 = sphi 0, %s92
      %s94 = sphi 0, %s92
      %s95 = sphi 0, %s94
      %s109 = sphi 0, %s95
      %s113 = sphi 0, %s113
      %s115 = sphi 0, %s113
      %s116 = sphi 0, %s115
      %s130 = sphi 0, %s116
      %s136 = sphi 0, %s138
      %s139 = sphi 0, %s136
      %s140 = sphi 0, %s139
      %s156 = sphi 0, %s140
    $region4: #{tpu_custom_call.1} parent=1 // loop_header_branch
      %19 = sbr.rel (%p17) target = $region8
    $region5: #{tpu_custom_call.1} parent=1 // loop_body
      %s21 = ssub.s32 %s16, 1
      %s22 = ssub.s32 %s16, 2
      %s23 = sadd.s32 %s16, 1
      %s24 = ssub.s32 %s16, %s23
      %p25 = scmp.eq.s32.totalorder %s24, 0
      %s27 = sadd.s32 %s26, 1
      %s28 = scalar_select %p25, %s26, %s27
      %p31 = pneg %p25
      %p32 = scmp.eq.s32.totalorder %s16, 1
      %p33 = por %p31, %p32
      %p34 = scmp.ne.s32.totalorder %s26, %s29
      %p35 = scmp.eq.s32.totalorder %s16, 0
      %p36 = por %p34, %p35
      %p37 = scmp.ne.s32.totalorder %s26, %s29
      %p38 = scmp.eq.s32.totalorder %s21, 1
      %p39 = por %p37, %p38
      %p40 = scmp.ne.s32.totalorder %s29, %s30
      %p41 = scmp.eq.s32.totalorder %s21, 0
      %p42 = por %p40, %p41
      %p43 = scmp.ne.s32.totalorder %s29, %s30
      %p44 = scmp.eq.s32.totalorder %s22, 1
      %p45 = por %p43, %p44
      %p47 = scmp.ne.s32.totalorder %s30, %s46
      %p48 = scmp.eq.s32.totalorder %s22, 0
      %p49 = por %p47, %p48
      %s51 = sadd.s32 %s50, 1
      %p54 = scmp.eq.s32.totalorder %s16, 1
      %p55 = scmp.ne.s32.totalorder %s50, %s52
      %p56 = scmp.eq.s32.totalorder %s16, 0
      %p57 = por %p55, %p56
      %p58 = scmp.ne.s32.totalorder %s50, %s52
      %p59 = scmp.eq.s32.totalorder %s21, 1
      %p60 = por %p58, %p59
      %p61 = scmp.ne.s32.totalorder %s52, %s53
      %p62 = scmp.eq.s32.totalorder %s21, 0
      %p63 = por %p61, %p62
      %p64 = scmp.ne.s32.totalorder %s52, %s53
      %p65 = scmp.eq.s32.totalorder %s22, 1
      %p66 = por %p64, %p65
      %p68 = scmp.ne.s32.totalorder %s53, %s67
      %p69 = scmp.eq.s32.totalorder %s22, 0
      %p70 = por %p68, %p69
      %s72 = sadd.s32 %s71, 1
      %p75 = scmp.eq.s32.totalorder %s16, 1
      %p76 = scmp.ne.s32.totalorder %s71, %s73
      %p77 = scmp.eq.s32.totalorder %s16, 0
      %p78 = por %p76, %p77
      %p79 = scmp.ne.s32.totalorder %s71, %s73
      %p80 = scmp.eq.s32.totalorder %s21, 1
      %p81 = por %p79, %p80
      %p82 = scmp.ne.s32.totalorder %s73, %s74
      %p83 = scmp.eq.s32.totalorder %s21, 0
      %p84 = por %p82, %p83
      %p85 = scmp.ne.s32.totalorder %s73, %s74
      %p86 = scmp.eq.s32.totalorder %s22, 1
      %p87 = por %p85, %p86
      %p89 = scmp.ne.s32.totalorder %s74, %s88
      %p90 = scmp.eq.s32.totalorder %s22, 0
      %p91 = por %p89, %p90
      %s93 = sadd.s32 %s92, 1
      %p96 = scmp.eq.s32.totalorder %s16, 1
      %p97 = scmp.ne.s32.totalorder %s92, %s94
      %p98 = scmp.eq.s32.totalorder %s16, 0
      %p99 = por %p97, %p98
      %p100 = scmp.ne.s32.totalorder %s92, %s94
      %p101 = scmp.eq.s32.totalorder %s21, 1
      %p102 = por %p100, %p101
      %p103 = scmp.ne.s32.totalorder %s94, %s95
      %p104 = scmp.eq.s32.totalorder %s21, 0
      %p105 = por %p103, %p104
      %p106 = scmp.ne.s32.totalorder %s94, %s95
      %p107 = scmp.eq.s32.totalorder %s22, 1
      %p108 = por %p106, %p107
      %p110 = scmp.ne.s32.totalorder %s95, %s109
      %p111 = scmp.eq.s32.totalorder %s22, 0
      %p112 = por %p110, %p111
      %s114 = sadd.s32 %s113, 1
      %p117 = scmp.eq.s32.totalorder %s16, 1
      %p118 = scmp.ne.s32.totalorder %s113, %s115
      %p119 = scmp.eq.s32.totalorder %s16, 0
      %p120 = por %p118, %p119
      %p121 = scmp.ne.s32.totalorder %s113, %s115
      %p122 = scmp.eq.s32.totalorder %s21, 1
      %p123 = por %p121, %p122
      %p124 = scmp.ne.s32.totalorder %s115, %s116
      %p125 = scmp.eq.s32.totalorder %s21, 0
      %p126 = por %p124, %p125
      %p127 = scmp.ne.s32.totalorder %s115, %s116
      %p128 = scmp.eq.s32.totalorder %s22, 1
      %p129 = por %p127, %p128
      %p131 = scmp.ne.s32.totalorder %s116, %s130
      %p132 = scmp.eq.s32.totalorder %s22, 0
      %p133 = por %p131, %p132
      %s134 = ssub.s32 %s16, %s23
      %p135 = scmp.eq.s32.totalorder %s134, 0
      %s137 = sadd.s32 %s136, 1
      %s138 = scalar_select %p135, %s136, %s137
      %p141 = pneg %p135
      %p142 = scmp.eq.s32.totalorder %s16, 1
      %p143 = por %p141, %p142
      %p144 = scmp.ne.s32.totalorder %s136, %s139
      %p145 = scmp.eq.s32.totalorder %s16, 0
      %p146 = por %p144, %p145
      %p147 = scmp.ne.s32.totalorder %s136, %s139
      %p148 = scmp.eq.s32.totalorder %s21, 1
      %p149 = por %p147, %p148
      %p150 = scmp.ne.s32.totalorder %s139, %s140
      %p151 = scmp.eq.s32.totalorder %s21, 0
      %p152 = por %p150, %p151
      %p153 = scmp.ne.s32.totalorder %s139, %s140
      %p154 = scmp.eq.s32.totalorder %s22, 1
      %p155 = por %p153, %p154
      %p157 = scmp.ne.s32.totalorder %s140, %s156
      %p158 = scmp.eq.s32.totalorder %s22, 0
      %p159 = por %p157, %p158
      %p160 = scmp.le.s32.totalorder 1, %s16
      %p161 = scmp.lt.s32.totalorder %s16, 3
      %p162 = pnand %p160, %p161
      %p163 = pneg %p162
      // Predicated region
      $region9: #{tpu_custom_call.1} parent=5 // pred_check
        _
      $region10: #{tpu_custom_call.1} parent=5 // pred_check_branch
        %165 = sbr.rel (%p162) target = $region12
      $region11: #{tpu_custom_call.1} parent=5 // pred_region
        %s166 = ssub.s32 %s16, 1
        // Predicated region
        $region13: #{tpu_custom_call.1} parent=11 // pred_check
          %p167 = pneg %p63
        $region14: #{tpu_custom_call.1} parent=11 // pred_check_branch
          %169 = sbr.rel (%p167) target = $region16
        $region15: #{tpu_custom_call.1} parent=11 // pred_region
          _
        $region16: #{tpu_custom_call.1} parent=11 // pred_fallthru
          _
        // Predicated region
        $region17: #{tpu_custom_call.1} parent=11 // pred_check
          %p170 = pneg %p84
        $region18: #{tpu_custom_call.1} parent=11 // pred_check_branch
          %172 = sbr.rel (%p170) target = $region20
        $region19: #{tpu_custom_call.1} parent=11 // pred_region
          _
        $region20: #{tpu_custom_call.1} parent=11 // pred_fallthru
          _
        // Predicated region
        $region21: #{tpu_custom_call.1} parent=11 // pred_check
          %p173 = pneg %p105
        $region22: #{tpu_custom_call.1} parent=11 // pred_check_branch
          %175 = sbr.rel (%p173) target = $region24
        $region23: #{tpu_custom_call.1} parent=11 // pred_region
          _
        $region24: #{tpu_custom_call.1} parent=11 // pred_fallthru
          _
        // Predicated region
        $region25: #{tpu_custom_call.1} parent=11 // pred_check
          %p176 = pneg %p126
        $region26: #{tpu_custom_call.1} parent=11 // pred_check_branch
          %178 = sbr.rel (%p176) target = $region28
        $region27: #{tpu_custom_call.1} parent=11 // pred_region
          _
        $region28: #{tpu_custom_call.1} parent=11 // pred_fallthru
          _
      $region12: #{tpu_custom_call.1} parent=5 // pred_fallthru
        _
      %p179 = scmp.lt.s32.totalorder %s16, 2
      // Predicated region
      $region29: #{tpu_custom_call.1} parent=5 // pred_check
        %p180 = pneg %p179
      $region30: #{tpu_custom_call.1} parent=5 // pred_check_branch
        %182 = sbr.rel (%p180) target = $region32
      $region31: #{tpu_custom_call.1} parent=5 // pred_region
        // Predicated region
        $region33: #{tpu_custom_call.1} parent=31 // pred_check
          %p183 = pneg %p36
        $region34: #{tpu_custom_call.1} parent=31 // pred_check_branch
          %185 = sbr.rel (%p183) target = $region36
        $region35: #{tpu_custom_call.1} parent=31 // pred_region
          %s186 = smul.u32 32, %s16
          %p187 = scmp.lt.s32.totalorder %s186, 63
          %s188 = scalar_select %p187, %s186, 63
          %s189 = smul.addr %s188, 8
          %s190 = scalar_lea.vmem %s0, %s189
          %s191 = smul.u32 32, %s16
        $region36: #{tpu_custom_call.1} parent=31 // pred_fallthru
          _
      $region32: #{tpu_custom_call.1} parent=5 // pred_fallthru
        _
      %p192 = scmp.le.s32.totalorder 1, %s16
      %p193 = scmp.lt.s32.totalorder %s16, 3
      %p194 = pnand %p192, %p193
      %p195 = pneg %p194
      // Predicated region
      $region37: #{tpu_custom_call.1} parent=5 // pred_check
        _
      $region38: #{tpu_custom_call.1} parent=5 // pred_check_branch
        %197 = sbr.rel (%p194) target = $region40
      $region39: #{tpu_custom_call.1} parent=5 // pred_region
        %s198 = ssub.s32 %s16, 1
        %s199 = smul.u32 32, %s21
        %p200 = scmp.lt.s32.totalorder %s199, 63
        %s201 = scalar_select %p200, %s199, 63
        %s202 = smul.addr %s201, 8
        %s203 = scalar_lea.vmem %s0, %s202
        %p204 = pneg %p42
        %p205 = pneg %p39
        %p206 = pneg %p63
        %p207 = pneg %p60
        %p208 = pneg %p84
        %p209 = pneg %p81
        %p210 = pneg %p105
        %p211 = pneg %p102
        %p212 = pneg %p126
        %p213 = pneg %p123
        %p214 = pneg %p152
        %p215 = pneg %p149
        %s216 = sand.u32 %s139, 1
        %s217 = scalar_lea.sflag [#allocation5], %s216
        %s218 = sand.u32 %s139, 1
        %s219 = smul.addr %s218, 2
        %s220 = scalar_lea.vmem [#allocation4], %s219
        %s221 = smul.u32 32, %s21
        %p222 = scmp.lt.s32.totalorder %s221, 63
        %s223 = scalar_select %p222, %s221, 63
        %s224 = smul.addr %s223, 8
        %s225 = scalar_lea.vmem %s0, %s224
        %s226 = smul.u32 32, %s21
        %s227 = smul.u32 2, %s21
        %228 = vst [vmem:[#allocation2] sm:$0xff] 0.0
        %229 = vst [vmem:[#allocation2 + $0x8] sm:$0xff] 0.0
        %230 = vst [vmem:[#allocation2 + $0x10] sm:$0xff] 0.0
        %231 = vst [vmem:[#allocation2 + $0x18] sm:$0xff] 0.0
        %232 = vst [vmem:[#allocation2 + $0x20] sm:$0xff] 0.0
        %233 = vst [vmem:[#allocation2 + $0x28] sm:$0xff] 0.0
        %234 = vst [vmem:[#allocation2 + $0x30] sm:$0xff] 0.0
        %235 = vst [vmem:[#allocation2 + $0x38] sm:$0xff] 0.0
        %236 = vst [vmem:[#allocation2 + $0x40] sm:$0xff] 0.0
        %237 = vst [vmem:[#allocation2 + $0x48] sm:$0xff] 0.0
        %238 = vst [vmem:[#allocation2 + $0x50] sm:$0xff] 0.0
        %239 = vst [vmem:[#allocation2 + $0x58] sm:$0xff] 0.0
        %240 = vst [vmem:[#allocation2 + $0x60] sm:$0xff] 0.0
        %241 = vst [vmem:[#allocation2 + $0x68] sm:$0xff] 0.0
        %242 = vst [vmem:[#allocation2 + $0x70] sm:$0xff] 0.0
        %243 = vst [vmem:[#allocation2 + $0x78] sm:$0xff] 0.0
        %244 = vst [vmem:[#allocation2 + $0x80] sm:$0xff] 0.0
        %245 = vst [vmem:[#allocation2 + $0x88] sm:$0xff] 0.0
        %246 = vst [vmem:[#allocation2 + $0x90] sm:$0xff] 0.0
        %247 = vst [vmem:[#allocation2 + $0x98] sm:$0xff] 0.0
        %248 = vst [vmem:[#allocation2 + $0xa0] sm:$0xff] 0.0
        %249 = vst [vmem:[#allocation2 + $0xa8] sm:$0xff] 0.0
        %250 = vst [vmem:[#allocation2 + $0xb0] sm:$0xff] 0.0
        %251 = vst [vmem:[#allocation2 + $0xb8] sm:$0xff] 0.0
        %252 = vst [vmem:[#allocation2 + $0xc0] sm:$0xff] 0.0
        %253 = vst [vmem:[#allocation2 + $0xc8] sm:$0xff] 0.0
        %254 = vst [vmem:[#allocation2 + $0xd0] sm:$0xff] 0.0
        %255 = vst [vmem:[#allocation2 + $0xd8] sm:$0xff] 0.0
        %256 = vst [vmem:[#allocation2 + $0xe0] sm:$0xff] 0.0
        %257 = vst [vmem:[#allocation2 + $0xe8] sm:$0xff] 0.0
        %258 = vst [vmem:[#allocation2 + $0xf0] sm:$0xff] 0.0
        %259 = vst [vmem:[#allocation2 + $0xf8] sm:$0xff] 0.0
        %v260 = vld [vmem:[%s225] sm:$0xff]
        %v261 = vld [vmem:[%s225 + $0x8] sm:$0xff]
        %v262 = vld [vmem:[%s225 + $0x10] sm:$0xff]
        %v263 = vld [vmem:[%s225 + $0x18] sm:$0xff]
        %v264 = vld [vmem:[%s225 + $0x20] sm:$0xff]
        %v265 = vld [vmem:[%s225 + $0x28] sm:$0xff]
        %v266 = vld [vmem:[%s225 + $0x30] sm:$0xff]
        %v267 = vld [vmem:[%s225 + $0x38] sm:$0xff]
        %v268 = vld [vmem:[%s225 + $0x40] sm:$0xff]
        %v269 = vld [vmem:[%s225 + $0x48] sm:$0xff]
        %v270 = vld [vmem:[%s225 + $0x50] sm:$0xff]
        %v271 = vld [vmem:[%s225 + $0x58] sm:$0xff]
        %v272 = vld [vmem:[%s225 + $0x60] sm:$0xff]
        %v273 = vld [vmem:[%s225 + $0x68] sm:$0xff]
        %v274 = vld [vmem:[%s225 + $0x70] sm:$0xff]
        %v275 = vld [vmem:[%s225 + $0x78] sm:$0xff]
        %v276 = vld [vmem:[%s225 + $0x80] sm:$0xff]
        %v277 = vld [vmem:[%s225 + $0x88] sm:$0xff]
        %v278 = vld [vmem:[%s225 + $0x90] sm:$0xff]
        %v279 = vld [vmem:[%s225 + $0x98] sm:$0xff]
        %v280 = vld [vmem:[%s225 + $0xa0] sm:$0xff]
        %v281 = vld [vmem:[%s225 + $0xa8] sm:$0xff]
        %v282 = vld [vmem:[%s225 + $0xb0] sm:$0xff]
        %v283 = vld [vmem:[%s225 + $0xb8] sm:$0xff]
        %v284 = vld [vmem:[%s225 + $0xc0] sm:$0xff]
        %v285 = vld [vmem:[%s225 + $0xc8] sm:$0xff]
        %v286 = vld [vmem:[%s225 + $0xd0] sm:$0xff]
        %v287 = vld [vmem:[%s225 + $0xd8] sm:$0xff]
        %v288 = vld [vmem:[%s225 + $0xe0] sm:$0xff]
        %v289 = vld [vmem:[%s225 + $0xe8] sm:$0xff]
        %v290 = vld [vmem:[%s225 + $0xf0] sm:$0xff]
        %v291 = vld [vmem:[%s225 + $0xf8] sm:$0xff]
        %vm292 = vcmask 121856
        %293 = vst.msk [vmem:[#allocation2] sm:$0xff] %vm292, %v260
        %294 = vst.msk [vmem:[#allocation2 + $0x8] sm:$0xff] %vm292, %v261
        %295 = vst.msk [vmem:[#allocation2 + $0x10] sm:$0xff] %vm292, %v262
        %296 = vst.msk [vmem:[#allocation2 + $0x18] sm:$0xff] %vm292, %v263
        %297 = vst.msk [vmem:[#allocation2 + $0x20] sm:$0xff] %vm292, %v264
        %298 = vst.msk [vmem:[#allocation2 + $0x28] sm:$0xff] %vm292, %v265
        %299 = vst.msk [vmem:[#allocation2 + $0x30] sm:$0xff] %vm292, %v266
        %300 = vst.msk [vmem:[#allocation2 + $0x38] sm:$0xff] %vm292, %v267
        %301 = vst.msk [vmem:[#allocation2 + $0x40] sm:$0xff] %vm292, %v268
        %302 = vst.msk [vmem:[#allocation2 + $0x48] sm:$0xff] %vm292, %v269
        %303 = vst.msk [vmem:[#allocation2 + $0x50] sm:$0xff] %vm292, %v270
        %304 = vst.msk [vmem:[#allocation2 + $0x58] sm:$0xff] %vm292, %v271
        %305 = vst.msk [vmem:[#allocation2 + $0x60] sm:$0xff] %vm292, %v272
        %306 = vst.msk [vmem:[#allocation2 + $0x68] sm:$0xff] %vm292, %v273
        %307 = vst.msk [vmem:[#allocation2 + $0x70] sm:$0xff] %vm292, %v274
        %308 = vst.msk [vmem:[#allocation2 + $0x78] sm:$0xff] %vm292, %v275
        %309 = vst.msk [vmem:[#allocation2 + $0x80] sm:$0xff] %vm292, %v276
        %310 = vst.msk [vmem:[#allocation2 + $0x88] sm:$0xff] %vm292, %v277
        %311 = vst.msk [vmem:[#allocation2 + $0x90] sm:$0xff] %vm292, %v278
        %312 = vst.msk [vmem:[#allocation2 + $0x98] sm:$0xff] %vm292, %v279
        %313 = vst.msk [vmem:[#allocation2 + $0xa0] sm:$0xff] %vm292, %v280
        %314 = vst.msk [vmem:[#allocation2 + $0xa8] sm:$0xff] %vm292, %v281
        %315 = vst.msk [vmem:[#allocation2 + $0xb0] sm:$0xff] %vm292, %v282
        %316 = vst.msk [vmem:[#allocation2 + $0xb8] sm:$0xff] %vm292, %v283
        %317 = vst.msk [vmem:[#allocation2 + $0xc0] sm:$0xff] %vm292, %v284
        %318 = vst.msk [vmem:[#allocation2 + $0xc8] sm:$0xff] %vm292, %v285
        %319 = vst.msk [vmem:[#allocation2 + $0xd0] sm:$0xff] %vm292, %v286
        %320 = vst.msk [vmem:[#allocation2 + $0xd8] sm:$0xff] %vm292, %v287
        %321 = vst.msk [vmem:[#allocation2 + $0xe0] sm:$0xff] %vm292, %v288
        %322 = vst.msk [vmem:[#allocation2 + $0xe8] sm:$0xff] %vm292, %v289
        %323 = vst.msk [vmem:[#allocation2 + $0xf0] sm:$0xff] %vm292, %v290
        %324 = vst.msk [vmem:[#allocation2 + $0xf8] sm:$0xff] %vm292, %v291
        %v325 = vld [vmem:[%s2] sm:$0x1f]
        %v326 = vld [vmem:[%s1] sm:$0xff]
        %v327 = vld [vmem:[%s1 + $0x8] sm:$0xff]
        %v328 = vld [vmem:[%s1 + $0x10] sm:$0xff]
        %v329 = vld [vmem:[%s1 + $0x18] sm:$0xff]
        %v330 = vld [vmem:[%s1 + $0x20] sm:$0xff]
        %v331 = vld [vmem:[%s1 + $0x28] sm:$0xff]
        %v332 = vld [vmem:[%s1 + $0x30] sm:$0xff]
        %v333 = vld [vmem:[%s1 + $0x38] sm:$0xff]
        %v334 = vld [vmem:[%s1 + $0x40] sm:$0xff]
        %v335 = vld [vmem:[%s1 + $0x48] sm:$0xff]
        %v336 = vld [vmem:[%s1 + $0x50] sm:$0xff]
        %v337 = vld [vmem:[%s1 + $0x58] sm:$0xff]
        %v338 = vld [vmem:[%s1 + $0x60] sm:$0xff]
        %v339 = vld [vmem:[%s1 + $0x68] sm:$0xff]
        %v340 = vld [vmem:[%s1 + $0x70] sm:$0xff]
        %v341 = vld [vmem:[%s1 + $0x78] sm:$0xff]
        %v342 = vld [vmem:[#allocation2] sm:$0xff]
        %v343 = vld [vmem:[#allocation2 + $0x8] sm:$0xff]
        %v344 = vld [vmem:[#allocation2 + $0x10] sm:$0xff]
        %v345 = vld [vmem:[#allocation2 + $0x18] sm:$0xff]
        %v346 = vld [vmem:[#allocation2 + $0x20] sm:$0xff]
        %v347 = vld [vmem:[#allocation2 + $0x28] sm:$0xff]
        %v348 = vld [vmem:[#allocation2 + $0x30] sm:$0xff]
        %v349 = vld [vmem:[#allocation2 + $0x38] sm:$0xff]
        %v350 = vld [vmem:[#allocation2 + $0x40] sm:$0xff]
        %v351 = vld [vmem:[#allocation2 + $0x48] sm:$0xff]
        %v352 = vld [vmem:[#allocation2 + $0x50] sm:$0xff]
        %v353 = vld [vmem:[#allocation2 + $0x58] sm:$0xff]
        %v354 = vld [vmem:[#allocation2 + $0x60] sm:$0xff]
        %v355 = vld [vmem:[#allocation2 + $0x68] sm:$0xff]
        %v356 = vld [vmem:[#allocation2 + $0x70] sm:$0xff]
        %v357 = vld [vmem:[#allocation2 + $0x78] sm:$0xff]
        %v358 = vld [vmem:[#allocation2 + $0x80] sm:$0xff]
        %v359 = vld [vmem:[#allocation2 + $0x88] sm:$0xff]
        %v360 = vld [vmem:[#allocation2 + $0x90] sm:$0xff]
        %v361 = vld [vmem:[#allocation2 + $0x98] sm:$0xff]
        %v362 = vld [vmem:[#allocation2 + $0xa0] sm:$0xff]
        %v363 = vld [vmem:[#allocation2 + $0xa8] sm:$0xff]
        %v364 = vld [vmem:[#allocation2 + $0xb0] sm:$0xff]
        %v365 = vld [vmem:[#allocation2 + $0xb8] sm:$0xff]
        %v366 = vld [vmem:[#allocation2 + $0xc0] sm:$0xff]
        %v367 = vld [vmem:[#allocation2 + $0xc8] sm:$0xff]
        %v368 = vld [vmem:[#allocation2 + $0xd0] sm:$0xff]
        %v369 = vld [vmem:[#allocation2 + $0xd8] sm:$0xff]
        %v370 = vld [vmem:[#allocation2 + $0xe0] sm:$0xff]
        %v371 = vld [vmem:[#allocation2 + $0xe8] sm:$0xff]
        %v372 = vld [vmem:[#allocation2 + $0xf0] sm:$0xff]
        %v373 = vld [vmem:[#allocation2 + $0xf8] sm:$0xff]
        %v374 = vperm.slane %v325, 0
        %375 = vmatpush.msra.mxu0 %v341
        %376 = vmatpush.msra.mxu0 %v340
        %377 = vmatpush.msra.mxu0 %v339
        %378 = vmatpush.msra.mxu0 %v338
        %379 = vmatpush.msra.mxu0 %v337
        %380 = vmatpush.msra.mxu0 %v336
        %381 = vmatpush.msra.mxu0 %v335
        %382 = vmatpush.msra.mxu0 %v334
        %383 = vmatpush.msra.mxu0 %v333
        %384 = vmatpush.msra.mxu0 %v332
        %385 = vmatpush.msra.mxu0 %v331
        %386 = vmatpush.msra.mxu0 %v330
        %387 = vmatpush.msra.mxu0 %v329
        %388 = vmatpush.msra.mxu0 %v328
        %389 = vmatpush.msra.mxu0 %v327
        %390 = vmatpush.msra.mxu0 %v326
        %391 = vmatmul.f32.gmra.mxu0 %v342
        %v392 = vpop.f32.mrf.mxu0
        %v393 = vadd.f32 %v374, %v392
        %394 = vmatmul.f32.gmra.mxu0 %v343
        %v395 = vpop.f32.mrf.mxu0
        %v396 = vadd.f32 %v374, %v395
        %397 = vmatmul.f32.gmra.mxu0 %v344
        %v398 = vpop.f32.mrf.mxu0
        %v399 = vadd.f32 %v374, %v398
        %400 = vmatmul.f32.gmra.mxu0 %v345
        %v401 = vpop.f32.mrf.mxu0
        %v402 = vadd.f32 %v374, %v401
        %403 = vmatmul.f32.gmra.mxu0 %v346
        %v404 = vpop.f32.mrf.mxu0
        %v405 = vadd.f32 %v374, %v404
        %406 = vmatmul.f32.gmra.mxu0 %v347
        %v407 = vpop.f32.mrf.mxu0
        %v408 = vadd.f32 %v374, %v407
        %409 = vmatmul.f32.gmra.mxu0 %v348
        %v410 = vpop.f32.mrf.mxu0
        %v411 = vadd.f32 %v374, %v410
        %412 = vmatmul.f32.gmra.mxu0 %v349
        %v413 = vpop.f32.mrf.mxu0
        %v414 = vadd.f32 %v374, %v413
        %415 = vmatmul.f32.gmra.mxu0 %v350
        %v416 = vpop.f32.mrf.mxu0
        %v417 = vadd.f32 %v374, %v416
        %418 = vmatmul.f32.gmra.mxu0 %v351
        %v419 = vpop.f32.mrf.mxu0
        %v420 = vadd.f32 %v374, %v419
        %421 = vmatmul.f32.gmra.mxu0 %v352
        %v422 = vpop.f32.mrf.mxu0
        %v423 = vadd.f32 %v374, %v422
        %424 = vmatmul.f32.gmra.mxu0 %v353
        %v425 = vpop.f32.mrf.mxu0
        %v426 = vadd.f32 %v374, %v425
        %427 = vmatmul.f32.gmra.mxu0 %v354
        %v428 = vpop.f32.mrf.mxu0
        %v429 = vadd.f32 %v374, %v428
        %430 = vmatmul.f32.gmra.mxu0 %v355
        %v431 = vpop.f32.mrf.mxu0
        %v432 = vadd.f32 %v374, %v431
        %433 = vmatmul.f32.gmra.mxu0 %v356
        %v434 = vpop.f32.mrf.mxu0
        %v435 = vadd.f32 %v374, %v434
        %436 = vmatmul.f32.gmra.mxu0 %v357
        %v437 = vpop.f32.mrf.mxu0
        %v438 = vadd.f32 %v374, %v437
        %439 = vmatmul.f32.gmra.mxu0 %v358
        %v440 = vpop.f32.mrf.mxu0
        %v441 = vadd.f32 %v374, %v440
        %442 = vmatmul.f32.gmra.mxu0 %v359
        %v443 = vpop.f32.mrf.mxu0
        %v444 = vadd.f32 %v374, %v443
        %445 = vmatmul.f32.gmra.mxu0 %v360
        %v446 = vpop.f32.mrf.mxu0
        %v447 = vadd.f32 %v374, %v446
        %448 = vmatmul.f32.gmra.mxu0 %v361
        %v449 = vpop.f32.mrf.mxu0
        %v450 = vadd.f32 %v374, %v449
        %451 = vmatmul.f32.gmra.mxu0 %v362
        %v452 = vpop.f32.mrf.mxu0
        %v453 = vadd.f32 %v374, %v452
        %454 = vmatmul.f32.gmra.mxu0 %v363
        %v455 = vpop.f32.mrf.mxu0
        %v456 = vadd.f32 %v374, %v455
        %457 = vmatmul.f32.gmra.mxu0 %v364
        %v458 = vpop.f32.mrf.mxu0
        %v459 = vadd.f32 %v374, %v458
        %460 = vmatmul.f32.gmra.mxu0 %v365
        %v461 = vpop.f32.mrf.mxu0
        %v462 = vadd.f32 %v374, %v461
        %463 = vmatmul.f32.gmra.mxu0 %v366
        %v464 = vpop.f32.mrf.mxu0
        %v465 = vadd.f32 %v374, %v464
        %466 = vmatmul.f32.gmra.mxu0 %v367
        %v467 = vpop.f32.mrf.mxu0
        %v468 = vadd.f32 %v374, %v467
        %469 = vmatmul.f32.gmra.mxu0 %v368
        %v470 = vpop.f32.mrf.mxu0
        %v471 = vadd.f32 %v374, %v470
        %472 = vmatmul.f32.gmra.mxu0 %v369
        %v473 = vpop.f32.mrf.mxu0
        %v474 = vadd.f32 %v374, %v473
        %475 = vmatmul.f32.gmra.mxu0 %v370
        %v476 = vpop.f32.mrf.mxu0
        %v477 = vadd.f32 %v374, %v476
        %478 = vmatmul.f32.gmra.mxu0 %v371
        %v479 = vpop.f32.mrf.mxu0
        %v480 = vadd.f32 %v374, %v479
        %481 = vmatmul.f32.gmra.mxu0 %v372
        %v482 = vpop.f32.mrf.mxu0
        %v483 = vadd.f32 %v374, %v482
        %484 = vmatmul.f32.gmra.mxu0 %v373
        %v485 = vpop.f32.mrf.mxu0
        %v486 = vadd.f32 %v374, %v485
        %487 = vdwg.mxu0
        %v488 = vmax.f32 %v393, 0.0
        %v489 = vmax.f32 %v396, 0.0
        %v490 = vmax.f32 %v399, 0.0
        %v491 = vmax.f32 %v402, 0.0
        %v492 = vmax.f32 %v405, 0.0
        %v493 = vmax.f32 %v408, 0.0
        %v494 = vmax.f32 %v411, 0.0
        %v495 = vmax.f32 %v414, 0.0
        %v496 = vmax.f32 %v417, 0.0
        %v497 = vmax.f32 %v420, 0.0
        %v498 = vmax.f32 %v423, 0.0
        %v499 = vmax.f32 %v426, 0.0
        %v500 = vmax.f32 %v429, 0.0
        %v501 = vmax.f32 %v432, 0.0
        %v502 = vmax.f32 %v435, 0.0
        %v503 = vmax.f32 %v438, 0.0
        %v504 = vmax.f32 %v441, 0.0
        %v505 = vmax.f32 %v444, 0.0
        %v506 = vmax.f32 %v447, 0.0
        %v507 = vmax.f32 %v450, 0.0
        %v508 = vmax.f32 %v453, 0.0
        %v509 = vmax.f32 %v456, 0.0
        %v510 = vmax.f32 %v459, 0.0
        %v511 = vmax.f32 %v462, 0.0
        %v512 = vmax.f32 %v465, 0.0
        %v513 = vmax.f32 %v468, 0.0
        %v514 = vmax.f32 %v471, 0.0
        %v515 = vmax.f32 %v474, 0.0
        %v516 = vmax.f32 %v477, 0.0
        %v517 = vmax.f32 %v480, 0.0
        %v518 = vmax.f32 %v483, 0.0
        %v519 = vmax.f32 %v486, 0.0
        %552 = vrot.lane.b32.xlu0 %v488, 15
        %v553 = vpop.permute.xlu0 %552
        %554 = vrot.lane.b32.xlu0 %v489, 15
        %v555 = vpop.permute.xlu0 %554
        %556 = vrot.lane.b32.xlu0 %v490, 15
        %v557 = vpop.permute.xlu0 %556
        %558 = vrot.lane.b32.xlu0 %v491, 15
        %v559 = vpop.permute.xlu0 %558
        %560 = vrot.lane.b32.xlu0 %v492, 15
        %v561 = vpop.permute.xlu0 %560
        %562 = vrot.lane.b32.xlu0 %v493, 15
        %v563 = vpop.permute.xlu0 %562
        %564 = vrot.lane.b32.xlu0 %v494, 15
        %v565 = vpop.permute.xlu0 %564
        %566 = vrot.lane.b32.xlu0 %v495, 15
        %v567 = vpop.permute.xlu0 %566
        %568 = vrot.lane.b32.xlu0 %v496, 15
        %v569 = vpop.permute.xlu0 %568
        %570 = vrot.lane.b32.xlu0 %v497, 15
        %v571 = vpop.permute.xlu0 %570
        %572 = vrot.lane.b32.xlu0 %v498, 15
        %v573 = vpop.permute.xlu0 %572
        %574 = vrot.lane.b32.xlu0 %v499, 15
        %v575 = vpop.permute.xlu0 %574
        %576 = vrot.lane.b32.xlu0 %v500, 15
        %v577 = vpop.permute.xlu0 %576
        %578 = vrot.lane.b32.xlu0 %v501, 15
        %v579 = vpop.permute.xlu0 %578
        %580 = vrot.lane.b32.xlu0 %v502, 15
        %v581 = vpop.permute.xlu0 %580
        %582 = vrot.lane.b32.xlu0 %v503, 15
        %v583 = vpop.permute.xlu0 %582
        %584 = vrot.lane.b32.xlu0 %v504, 15
        %v585 = vpop.permute.xlu0 %584
        %586 = vrot.lane.b32.xlu0 %v505, 15
        %v587 = vpop.permute.xlu0 %586
        %588 = vrot.lane.b32.xlu0 %v506, 15
        %v589 = vpop.permute.xlu0 %588
        %590 = vrot.lane.b32.xlu0 %v507, 15
        %v591 = vpop.permute.xlu0 %590
        %592 = vrot.lane.b32.xlu0 %v508, 15
        %v593 = vpop.permute.xlu0 %592
        %594 = vrot.lane.b32.xlu0 %v509, 15
        %v595 = vpop.permute.xlu0 %594
        %596 = vrot.lane.b32.xlu0 %v510, 15
        %v597 = vpop.permute.xlu0 %596
        %598 = vrot.lane.b32.xlu0 %v511, 15
        %v599 = vpop.permute.xlu0 %598
        %600 = vrot.lane.b32.xlu0 %v512, 15
        %v601 = vpop.permute.xlu0 %600
        %602 = vrot.lane.b32.xlu0 %v513, 15
        %v603 = vpop.permute.xlu0 %602
        %604 = vrot.lane.b32.xlu0 %v514, 15
        %v605 = vpop.permute.xlu0 %604
        %606 = vrot.lane.b32.xlu0 %v515, 15
        %v607 = vpop.permute.xlu0 %606
        %608 = vrot.lane.b32.xlu0 %v516, 15
        %v609 = vpop.permute.xlu0 %608
        %610 = vrot.lane.b32.xlu0 %v517, 15
        %v611 = vpop.permute.xlu0 %610
        %612 = vrot.lane.b32.xlu0 %v518, 15
        %v613 = vpop.permute.xlu0 %612
        %614 = vrot.lane.b32.xlu0 %v519, 15
        %v615 = vpop.permute.xlu0 %614
        %vm648 = vcmask 203896
        %649 = vst.msk [vmem:[#allocation2] sm:$0xff] %vm648, %v553
        %650 = vst.msk [vmem:[#allocation2 + $0x8] sm:$0xff] %vm648, %v555
        %651 = vst.msk [vmem:[#allocation2 + $0x10] sm:$0xff] %vm648, %v557
        %652 = vst.msk [vmem:[#allocation2 + $0x18] sm:$0xff] %vm648, %v559
        %653 = vst.msk [vmem:[#allocation2 + $0x20] sm:$0xff] %vm648, %v561
        %654 = vst.msk [vmem:[#allocation2 + $0x28] sm:$0xff] %vm648, %v563
        %655 = vst.msk [vmem:[#allocation2 + $0x30] sm:$0xff] %vm648, %v565
        %656 = vst.msk [vmem:[#allocation2 + $0x38] sm:$0xff] %vm648, %v567
        %657 = vst.msk [vmem:[#allocation2 + $0x40] sm:$0xff] %vm648, %v569
        %658 = vst.msk [vmem:[#allocation2 + $0x48] sm:$0xff] %vm648, %v571
        %659 = vst.msk [vmem:[#allocation2 + $0x50] sm:$0xff] %vm648, %v573
        %660 = vst.msk [vmem:[#allocation2 + $0x58] sm:$0xff] %vm648, %v575
        %661 = vst.msk [vmem:[#allocation2 + $0x60] sm:$0xff] %vm648, %v577
        %662 = vst.msk [vmem:[#allocation2 + $0x68] sm:$0xff] %vm648, %v579
        %663 = vst.msk [vmem:[#allocation2 + $0x70] sm:$0xff] %vm648, %v581
        %664 = vst.msk [vmem:[#allocation2 + $0x78] sm:$0xff] %vm648, %v583
        %665 = vst.msk [vmem:[#allocation2 + $0x80] sm:$0xff] %vm648, %v585
        %666 = vst.msk [vmem:[#allocation2 + $0x88] sm:$0xff] %vm648, %v587
        %667 = vst.msk [vmem:[#allocation2 + $0x90] sm:$0xff] %vm648, %v589
        %668 = vst.msk [vmem:[#allocation2 + $0x98] sm:$0xff] %vm648, %v591
        %669 = vst.msk [vmem:[#allocation2 + $0xa0] sm:$0xff] %vm648, %v593
        %670 = vst.msk [vmem:[#allocation2 + $0xa8] sm:$0xff] %vm648, %v595
        %671 = vst.msk [vmem:[#allocation2 + $0xb0] sm:$0xff] %vm648, %v597
        %672 = vst.msk [vmem:[#allocation2 + $0xb8] sm:$0xff] %vm648, %v599
        %673 = vst.msk [vmem:[#allocation2 + $0xc0] sm:$0xff] %vm648, %v601
        %674 = vst.msk [vmem:[#allocation2 + $0xc8] sm:$0xff] %vm648, %v603
        %675 = vst.msk [vmem:[#allocation2 + $0xd0] sm:$0xff] %vm648, %v605
        %676 = vst.msk [vmem:[#allocation2 + $0xd8] sm:$0xff] %vm648, %v607
        %677 = vst.msk [vmem:[#allocation2 + $0xe0] sm:$0xff] %vm648, %v609
        %678 = vst.msk [vmem:[#allocation2 + $0xe8] sm:$0xff] %vm648, %v611
        %679 = vst.msk [vmem:[#allocation2 + $0xf0] sm:$0xff] %vm648, %v613
        %680 = vst.msk [vmem:[#allocation2 + $0xf8] sm:$0xff] %vm648, %v615
        %s681 = scalar_lea.vmem %s1, 128
        %v682 = vld [vmem:[%s681] sm:$0xff]
        %v683 = vld [vmem:[%s681 + $0x8] sm:$0xff]
        %v684 = vld [vmem:[%s681 + $0x10] sm:$0xff]
        %v685 = vld [vmem:[%s681 + $0x18] sm:$0xff]
        %v686 = vld [vmem:[%s681 + $0x20] sm:$0xff]
        %v687 = vld [vmem:[%s681 + $0x28] sm:$0xff]
        %v688 = vld [vmem:[%s681 + $0x30] sm:$0xff]
        %v689 = vld [vmem:[%s681 + $0x38] sm:$0xff]
        %v690 = vld [vmem:[%s681 + $0x40] sm:$0xff]
        %v691 = vld [vmem:[%s681 + $0x48] sm:$0xff]
        %v692 = vld [vmem:[%s681 + $0x50] sm:$0xff]
        %v693 = vld [vmem:[%s681 + $0x58] sm:$0xff]
        %v694 = vld [vmem:[%s681 + $0x60] sm:$0xff]
        %v695 = vld [vmem:[%s681 + $0x68] sm:$0xff]
        %v696 = vld [vmem:[%s681 + $0x70] sm:$0xff]
        %v697 = vld [vmem:[%s681 + $0x78] sm:$0xff]
        %v698 = vld [vmem:[#allocation2] sm:$0xff]
        %v699 = vld [vmem:[#allocation2 + $0x8] sm:$0xff]
        %v700 = vld [vmem:[#allocation2 + $0x10] sm:$0xff]
        %v701 = vld [vmem:[#allocation2 + $0x18] sm:$0xff]
        %v702 = vld [vmem:[#allocation2 + $0x20] sm:$0xff]
        %v703 = vld [vmem:[#allocation2 + $0x28] sm:$0xff]
        %v704 = vld [vmem:[#allocation2 + $0x30] sm:$0xff]
        %v705 = vld [vmem:[#allocation2 + $0x38] sm:$0xff]
        %v706 = vld [vmem:[#allocation2 + $0x40] sm:$0xff]
        %v707 = vld [vmem:[#allocation2 + $0x48] sm:$0xff]
        %v708 = vld [vmem:[#allocation2 + $0x50] sm:$0xff]
        %v709 = vld [vmem:[#allocation2 + $0x58] sm:$0xff]
        %v710 = vld [vmem:[#allocation2 + $0x60] sm:$0xff]
        %v711 = vld [vmem:[#allocation2 + $0x68] sm:$0xff]
        %v712 = vld [vmem:[#allocation2 + $0x70] sm:$0xff]
        %v713 = vld [vmem:[#allocation2 + $0x78] sm:$0xff]
        %v714 = vld [vmem:[#allocation2 + $0x80] sm:$0xff]
        %v715 = vld [vmem:[#allocation2 + $0x88] sm:$0xff]
        %v716 = vld [vmem:[#allocation2 + $0x90] sm:$0xff]
        %v717 = vld [vmem:[#allocation2 + $0x98] sm:$0xff]
        %v718 = vld [vmem:[#allocation2 + $0xa0] sm:$0xff]
        %v719 = vld [vmem:[#allocation2 + $0xa8] sm:$0xff]
        %v720 = vld [vmem:[#allocation2 + $0xb0] sm:$0xff]
        %v721 = vld [vmem:[#allocation2 + $0xb8] sm:$0xff]
        %v722 = vld [vmem:[#allocation2 + $0xc0] sm:$0xff]
        %v723 = vld [vmem:[#allocation2 + $0xc8] sm:$0xff]
        %v724 = vld [vmem:[#allocation2 + $0xd0] sm:$0xff]
        %v725 = vld [vmem:[#allocation2 + $0xd8] sm:$0xff]
        %v726 = vld [vmem:[#allocation2 + $0xe0] sm:$0xff]
        %v727 = vld [vmem:[#allocation2 + $0xe8] sm:$0xff]
        %v728 = vld [vmem:[#allocation2 + $0xf0] sm:$0xff]
        %v729 = vld [vmem:[#allocation2 + $0xf8] sm:$0xff]
        %v730 = vperm.slane %v325, 1
        %731 = vmatpush.msra.mxu0 %v697
        %732 = vmatpush.msra.mxu0 %v696
        %733 = vmatpush.msra.mxu0 %v695
        %734 = vmatpush.msra.mxu0 %v694
        %735 = vmatpush.msra.mxu0 %v693
        %736 = vmatpush.msra.mxu0 %v692
        %737 = vmatpush.msra.mxu0 %v691
        %738 = vmatpush.msra.mxu0 %v690
        %739 = vmatpush.msra.mxu0 %v689
        %740 = vmatpush.msra.mxu0 %v688
        %741 = vmatpush.msra.mxu0 %v687
        %742 = vmatpush.msra.mxu0 %v686
        %743 = vmatpush.msra.mxu0 %v685
        %744 = vmatpush.msra.mxu0 %v684
        %745 = vmatpush.msra.mxu0 %v683
        %746 = vmatpush.msra.mxu0 %v682
        %747 = vmatmul.f32.gmra.mxu0 %v698
        %v748 = vpop.f32.mrf.mxu0
        %v749 = vadd.f32 %v730, %v748
        %750 = vmatmul.f32.gmra.mxu0 %v699
        %v751 = vpop.f32.mrf.mxu0
        %v752 = vadd.f32 %v730, %v751
        %753 = vmatmul.f32.gmra.mxu0 %v700
        %v754 = vpop.f32.mrf.mxu0
        %v755 = vadd.f32 %v730, %v754
        %756 = vmatmul.f32.gmra.mxu0 %v701
        %v757 = vpop.f32.mrf.mxu0
        %v758 = vadd.f32 %v730, %v757
        %759 = vmatmul.f32.gmra.mxu0 %v702
        %v760 = vpop.f32.mrf.mxu0
        %v761 = vadd.f32 %v730, %v760
        %762 = vmatmul.f32.gmra.mxu0 %v703
        %v763 = vpop.f32.mrf.mxu0
        %v764 = vadd.f32 %v730, %v763
        %765 = vmatmul.f32.gmra.mxu0 %v704
        %v766 = vpop.f32.mrf.mxu0
        %v767 = vadd.f32 %v730, %v766
        %768 = vmatmul.f32.gmra.mxu0 %v705
        %v769 = vpop.f32.mrf.mxu0
        %v770 = vadd.f32 %v730, %v769
        %771 = vmatmul.f32.gmra.mxu0 %v706
        %v772 = vpop.f32.mrf.mxu0
        %v773 = vadd.f32 %v730, %v772
        %774 = vmatmul.f32.gmra.mxu0 %v707
        %v775 = vpop.f32.mrf.mxu0
        %v776 = vadd.f32 %v730, %v775
        %777 = vmatmul.f32.gmra.mxu0 %v708
        %v778 = vpop.f32.mrf.mxu0
        %v779 = vadd.f32 %v730, %v778
        %780 = vmatmul.f32.gmra.mxu0 %v709
        %v781 = vpop.f32.mrf.mxu0
        %v782 = vadd.f32 %v730, %v781
        %783 = vmatmul.f32.gmra.mxu0 %v710
        %v784 = vpop.f32.mrf.mxu0
        %v785 = vadd.f32 %v730, %v784
        %786 = vmatmul.f32.gmra.mxu0 %v711
        %v787 = vpop.f32.mrf.mxu0
        %v788 = vadd.f32 %v730, %v787
        %789 = vmatmul.f32.gmra.mxu0 %v712
        %v790 = vpop.f32.mrf.mxu0
        %v791 = vadd.f32 %v730, %v790
        %792 = vmatmul.f32.gmra.mxu0 %v713
        %v793 = vpop.f32.mrf.mxu0
        %v794 = vadd.f32 %v730, %v793
        %795 = vmatmul.f32.gmra.mxu0 %v714
        %v796 = vpop.f32.mrf.mxu0
        %v797 = vadd.f32 %v730, %v796
        %798 = vmatmul.f32.gmra.mxu0 %v715
        %v799 = vpop.f32.mrf.mxu0
        %v800 = vadd.f32 %v730, %v799
        %801 = vmatmul.f32.gmra.mxu0 %v716
        %v802 = vpop.f32.mrf.mxu0
        %v803 = vadd.f32 %v730, %v802
        %804 = vmatmul.f32.gmra.mxu0 %v717
        %v805 = vpop.f32.mrf.mxu0
        %v806 = vadd.f32 %v730, %v805
        %807 = vmatmul.f32.gmra.mxu0 %v718
        %v808 = vpop.f32.mrf.mxu0
        %v809 = vadd.f32 %v730, %v808
        %810 = vmatmul.f32.gmra.mxu0 %v719
        %v811 = vpop.f32.mrf.mxu0
        %v812 = vadd.f32 %v730, %v811
        %813 = vmatmul.f32.gmra.mxu0 %v720
        %v814 = vpop.f32.mrf.mxu0
        %v815 = vadd.f32 %v730, %v814
        %816 = vmatmul.f32.gmra.mxu0 %v721
        %v817 = vpop.f32.mrf.mxu0
        %v818 = vadd.f32 %v730, %v817
        %819 = vmatmul.f32.gmra.mxu0 %v722
        %v820 = vpop.f32.mrf.mxu0
        %v821 = vadd.f32 %v730, %v820
        %822 = vmatmul.f32.gmra.mxu0 %v723
        %v823 = vpop.f32.mrf.mxu0
        %v824 = vadd.f32 %v730, %v823
        %825 = vmatmul.f32.gmra.mxu0 %v724
        %v826 = vpop.f32.mrf.mxu0
        %v827 = vadd.f32 %v730, %v826
        %828 = vmatmul.f32.gmra.mxu0 %v725
        %v829 = vpop.f32.mrf.mxu0
        %v830 = vadd.f32 %v730, %v829
        %831 = vmatmul.f32.gmra.mxu0 %v726
        %v832 = vpop.f32.mrf.mxu0
        %v833 = vadd.f32 %v730, %v832
        %834 = vmatmul.f32.gmra.mxu0 %v727
        %v835 = vpop.f32.mrf.mxu0
        %v836 = vadd.f32 %v730, %v835
        %837 = vmatmul.f32.gmra.mxu0 %v728
        %v838 = vpop.f32.mrf.mxu0
        %v839 = vadd.f32 %v730, %v838
        %840 = vmatmul.f32.gmra.mxu0 %v729
        %v841 = vpop.f32.mrf.mxu0
        %v842 = vadd.f32 %v730, %v841
        %843 = vdwg.mxu0
        %v844 = vmax.f32 %v749, 0.0
        %v845 = vmax.f32 %v752, 0.0
        %v846 = vmax.f32 %v755, 0.0
        %v847 = vmax.f32 %v758, 0.0
        %v848 = vmax.f32 %v761, 0.0
        %v849 = vmax.f32 %v764, 0.0
        %v850 = vmax.f32 %v767, 0.0
        %v851 = vmax.f32 %v770, 0.0
        %v852 = vmax.f32 %v773, 0.0
        %v853 = vmax.f32 %v776, 0.0
        %v854 = vmax.f32 %v779, 0.0
        %v855 = vmax.f32 %v782, 0.0
        %v856 = vmax.f32 %v785, 0.0
        %v857 = vmax.f32 %v788, 0.0
        %v858 = vmax.f32 %v791, 0.0
        %v859 = vmax.f32 %v794, 0.0
        %v860 = vmax.f32 %v797, 0.0
        %v861 = vmax.f32 %v800, 0.0
        %v862 = vmax.f32 %v803, 0.0
        %v863 = vmax.f32 %v806, 0.0
        %v864 = vmax.f32 %v809, 0.0
        %v865 = vmax.f32 %v812, 0.0
        %v866 = vmax.f32 %v815, 0.0
        %v867 = vmax.f32 %v818, 0.0
        %v868 = vmax.f32 %v821, 0.0
        %v869 = vmax.f32 %v824, 0.0
        %v870 = vmax.f32 %v827, 0.0
        %v871 = vmax.f32 %v830, 0.0
        %v872 = vmax.f32 %v833, 0.0
        %v873 = vmax.f32 %v836, 0.0
        %v874 = vmax.f32 %v839, 0.0
        %v875 = vmax.f32 %v842, 0.0
        %908 = vrot.lane.b32.xlu0 %v844, 25
        %v909 = vpop.permute.xlu0 %908
        %910 = vrot.lane.b32.xlu0 %v845, 25
        %v911 = vpop.permute.xlu0 %910
        %912 = vrot.lane.b32.xlu0 %v846, 25
        %v913 = vpop.permute.xlu0 %912
        %914 = vrot.lane.b32.xlu0 %v847, 25
        %v915 = vpop.permute.xlu0 %914
        %916 = vrot.lane.b32.xlu0 %v848, 25
        %v917 = vpop.permute.xlu0 %916
        %918 = vrot.lane.b32.xlu0 %v849, 25
        %v919 = vpop.permute.xlu0 %918
        %920 = vrot.lane.b32.xlu0 %v850, 25
        %v921 = vpop.permute.xlu0 %920
        %922 = vrot.lane.b32.xlu0 %v851, 25
        %v923 = vpop.permute.xlu0 %922
        %924 = vrot.lane.b32.xlu0 %v852, 25
        %v925 = vpop.permute.xlu0 %924
        %926 = vrot.lane.b32.xlu0 %v853, 25
        %v927 = vpop.permute.xlu0 %926
        %928 = vrot.lane.b32.xlu0 %v854, 25
        %v929 = vpop.permute.xlu0 %928
        %930 = vrot.lane.b32.xlu0 %v855, 25
        %v931 = vpop.permute.xlu0 %930
        %932 = vrot.lane.b32.xlu0 %v856, 25
        %v933 = vpop.permute.xlu0 %932
        %934 = vrot.lane.b32.xlu0 %v857, 25
        %v935 = vpop.permute.xlu0 %934
        %936 = vrot.lane.b32.xlu0 %v858, 25
        %v937 = vpop.permute.xlu0 %936
        %938 = vrot.lane.b32.xlu0 %v859, 25
        %v939 = vpop.permute.xlu0 %938
        %940 = vrot.lane.b32.xlu0 %v860, 25
        %v941 = vpop.permute.xlu0 %940
        %942 = vrot.lane.b32.xlu0 %v861, 25
        %v943 = vpop.permute.xlu0 %942
        %944 = vrot.lane.b32.xlu0 %v862, 25
        %v945 = vpop.permute.xlu0 %944
        %946 = vrot.lane.b32.xlu0 %v863, 25
        %v947 = vpop.permute.xlu0 %946
        %948 = vrot.lane.b32.xlu0 %v864, 25
        %v949 = vpop.permute.xlu0 %948
        %950 = vrot.lane.b32.xlu0 %v865, 25
        %v951 = vpop.permute.xlu0 %950
        %952 = vrot.lane.b32.xlu0 %v866, 25
        %v953 = vpop.permute.xlu0 %952
        %954 = vrot.lane.b32.xlu0 %v867, 25
        %v955 = vpop.permute.xlu0 %954
        %956 = vrot.lane.b32.xlu0 %v868, 25
        %v957 = vpop.permute.xlu0 %956
        %958 = vrot.lane.b32.xlu0 %v869, 25
        %v959 = vpop.permute.xlu0 %958
        %960 = vrot.lane.b32.xlu0 %v870, 25
        %v961 = vpop.permute.xlu0 %960
        %962 = vrot.lane.b32.xlu0 %v871, 25
        %v963 = vpop.permute.xlu0 %962
        %964 = vrot.lane.b32.xlu0 %v872, 25
        %v965 = vpop.permute.xlu0 %964
        %966 = vrot.lane.b32.xlu0 %v873, 25
        %v967 = vpop.permute.xlu0 %966
        %968 = vrot.lane.b32.xlu0 %v874, 25
        %v969 = vpop.permute.xlu0 %968
        %970 = vrot.lane.b32.xlu0 %v875, 25
        %v971 = vpop.permute.xlu0 %970
        %vm1004 = vcmask 285896
        %1005 = vst.msk [vmem:[#allocation2] sm:$0xff] %vm1004, %v909
        %1006 = vst.msk [vmem:[#allocation2 + $0x8] sm:$0xff] %vm1004, %v911
        %1007 = vst.msk [vmem:[#allocation2 + $0x10] sm:$0xff] %vm1004, %v913
        %1008 = vst.msk [vmem:[#allocation2 + $0x18] sm:$0xff] %vm1004, %v915
        %1009 = vst.msk [vmem:[#allocation2 + $0x20] sm:$0xff] %vm1004, %v917
        %1010 = vst.msk [vmem:[#allocation2 + $0x28] sm:$0xff] %vm1004, %v919
        %1011 = vst.msk [vmem:[#allocation2 + $0x30] sm:$0xff] %vm1004, %v921
        %1012 = vst.msk [vmem:[#allocation2 + $0x38] sm:$0xff] %vm1004, %v923
        %1013 = vst.msk [vmem:[#allocation2 + $0x40] sm:$0xff] %vm1004, %v925
        %1014 = vst.msk [vmem:[#allocation2 + $0x48] sm:$0xff] %vm1004, %v927
        %1015 = vst.msk [vmem:[#allocation2 + $0x50] sm:$0xff] %vm1004, %v929
        %1016 = vst.msk [vmem:[#allocation2 + $0x58] sm:$0xff] %vm1004, %v931
        %1017 = vst.msk [vmem:[#allocation2 + $0x60] sm:$0xff] %vm1004, %v933
        %1018 = vst.msk [vmem:[#allocation2 + $0x68] sm:$0xff] %vm1004, %v935
        %1019 = vst.msk [vmem:[#allocation2 + $0x70] sm:$0xff] %vm1004, %v937
        %1020 = vst.msk [vmem:[#allocation2 + $0x78] sm:$0xff] %vm1004, %v939
        %1021 = vst.msk [vmem:[#allocation2 + $0x80] sm:$0xff] %vm1004, %v941
        %1022 = vst.msk [vmem:[#allocation2 + $0x88] sm:$0xff] %vm1004, %v943
        %1023 = vst.msk [vmem:[#allocation2 + $0x90] sm:$0xff] %vm1004, %v945
        %1024 = vst.msk [vmem:[#allocation2 + $0x98] sm:$0xff] %vm1004, %v947
        %1025 = vst.msk [vmem:[#allocation2 + $0xa0] sm:$0xff] %vm1004, %v949
        %1026 = vst.msk [vmem:[#allocation2 + $0xa8] sm:$0xff] %vm1004, %v951
        %1027 = vst.msk [vmem:[#allocation2 + $0xb0] sm:$0xff] %vm1004, %v953
        %1028 = vst.msk [vmem:[#allocation2 + $0xb8] sm:$0xff] %vm1004, %v955
        %1029 = vst.msk [vmem:[#allocation2 + $0xc0] sm:$0xff] %vm1004, %v957
        %1030 = vst.msk [vmem:[#allocation2 + $0xc8] sm:$0xff] %vm1004, %v959
        %1031 = vst.msk [vmem:[#allocation2 + $0xd0] sm:$0xff] %vm1004, %v961
        %1032 = vst.msk [vmem:[#allocation2 + $0xd8] sm:$0xff] %vm1004, %v963
        %1033 = vst.msk [vmem:[#allocation2 + $0xe0] sm:$0xff] %vm1004, %v965
        %1034 = vst.msk [vmem:[#allocation2 + $0xe8] sm:$0xff] %vm1004, %v967
        %1035 = vst.msk [vmem:[#allocation2 + $0xf0] sm:$0xff] %vm1004, %v969
        %1036 = vst.msk [vmem:[#allocation2 + $0xf8] sm:$0xff] %vm1004, %v971
        %s1037 = scalar_lea.vmem %s1, 256
        %v1038 = vld [vmem:[%s1037] sm:$0xff]
        %v1039 = vld [vmem:[%s1037 + $0x8] sm:$0xff]
        %v1040 = vld [vmem:[%s1037 + $0x10] sm:$0xff]
        %v1041 = vld [vmem:[%s1037 + $0x18] sm:$0xff]
        %v1042 = vld [vmem:[%s1037 + $0x20] sm:$0xff]
        %v1043 = vld [vmem:[%s1037 + $0x28] sm:$0xff]
        %v1044 = vld [vmem:[%s1037 + $0x30] sm:$0xff]
        %v1045 = vld [vmem:[%s1037 + $0x38] sm:$0xff]
        %v1046 = vld [vmem:[%s1037 + $0x40] sm:$0xff]
        %v1047 = vld [vmem:[%s1037 + $0x48] sm:$0xff]
        %v1048 = vld [vmem:[%s1037 + $0x50] sm:$0xff]
        %v1049 = vld [vmem:[%s1037 + $0x58] sm:$0xff]
        %v1050 = vld [vmem:[%s1037 + $0x60] sm:$0xff]
        %v1051 = vld [vmem:[%s1037 + $0x68] sm:$0xff]
        %v1052 = vld [vmem:[%s1037 + $0x70] sm:$0xff]
        %v1053 = vld [vmem:[%s1037 + $0x78] sm:$0xff]
        %v1054 = vld [vmem:[#allocation2] sm:$0xff]
        %v1055 = vld [vmem:[#allocation2 + $0x8] sm:$0xff]
        %v1056 = vld [vmem:[#allocation2 + $0x10] sm:$0xff]
        %v1057 = vld [vmem:[#allocation2 + $0x18] sm:$0xff]
        %v1058 = vld [vmem:[#allocation2 + $0x20] sm:$0xff]
        %v1059 = vld [vmem:[#allocation2 + $0x28] sm:$0xff]
        %v1060 = vld [vmem:[#allocation2 + $0x30] sm:$0xff]
        %v1061 = vld [vmem:[#allocation2 + $0x38] sm:$0xff]
        %v1062 = vld [vmem:[#allocation2 + $0x40] sm:$0xff]
        %v1063 = vld [vmem:[#allocation2 + $0x48] sm:$0xff]
        %v1064 = vld [vmem:[#allocation2 + $0x50] sm:$0xff]
        %v1065 = vld [vmem:[#allocation2 + $0x58] sm:$0xff]
        %v1066 = vld [vmem:[#allocation2 + $0x60] sm:$0xff]
        %v1067 = vld [vmem:[#allocation2 + $0x68] sm:$0xff]
        %v1068 = vld [vmem:[#allocation2 + $0x70] sm:$0xff]
        %v1069 = vld [vmem:[#allocation2 + $0x78] sm:$0xff]
        %v1070 = vld [vmem:[#allocation2 + $0x80] sm:$0xff]
        %v1071 = vld [vmem:[#allocation2 + $0x88] sm:$0xff]
        %v1072 = vld [vmem:[#allocation2 + $0x90] sm:$0xff]
        %v1073 = vld [vmem:[#allocation2 + $0x98] sm:$0xff]
        %v1074 = vld [vmem:[#allocation2 + $0xa0] sm:$0xff]
        %v1075 = vld [vmem:[#allocation2 + $0xa8] sm:$0xff]
        %v1076 = vld [vmem:[#allocation2 + $0xb0] sm:$0xff]
        %v1077 = vld [vmem:[#allocation2 + $0xb8] sm:$0xff]
        %v1078 = vld [vmem:[#allocation2 + $0xc0] sm:$0xff]
        %v1079 = vld [vmem:[#allocation2 + $0xc8] sm:$0xff]
        %v1080 = vld [vmem:[#allocation2 + $0xd0] sm:$0xff]
        %v1081 = vld [vmem:[#allocation2 + $0xd8] sm:$0xff]
        %v1082 = vld [vmem:[#allocation2 + $0xe0] sm:$0xff]
        %v1083 = vld [vmem:[#allocation2 + $0xe8] sm:$0xff]
        %v1084 = vld [vmem:[#allocation2 + $0xf0] sm:$0xff]
        %v1085 = vld [vmem:[#allocation2 + $0xf8] sm:$0xff]
        %v1086 = vperm.slane %v325, 2
        %1087 = vmatpush.msra.mxu0 %v1053
        %1088 = vmatpush.msra.mxu0 %v1052
        %1089 = vmatpush.msra.mxu0 %v1051
        %1090 = vmatpush.msra.mxu0 %v1050
        %1091 = vmatpush.msra.mxu0 %v1049
        %1092 = vmatpush.msra.mxu0 %v1048
        %1093 = vmatpush.msra.mxu0 %v1047
        %1094 = vmatpush.msra.mxu0 %v1046
        %1095 = vmatpush.msra.mxu0 %v1045
        %1096 = vmatpush.msra.mxu0 %v1044
        %1097 = vmatpush.msra.mxu0 %v1043
        %1098 = vmatpush.msra.mxu0 %v1042
        %1099 = vmatpush.msra.mxu0 %v1041
        %1100 = vmatpush.msra.mxu0 %v1040
        %1101 = vmatpush.msra.mxu0 %v1039
        %1102 = vmatpush.msra.mxu0 %v1038
        %1103 = vmatmul.f32.gmra.mxu0 %v1054
        %v1104 = vpop.f32.mrf.mxu0
        %v1105 = vadd.f32 %v1086, %v1104
        %1106 = vmatmul.f32.gmra.mxu0 %v1055
        %v1107 = vpop.f32.mrf.mxu0
        %v1108 = vadd.f32 %v1086, %v1107
        %1109 = vmatmul.f32.gmra.mxu0 %v1056
        %v1110 = vpop.f32.mrf.mxu0
        %v1111 = vadd.f32 %v1086, %v1110
        %1112 = vmatmul.f32.gmra.mxu0 %v1057
        %v1113 = vpop.f32.mrf.mxu0
        %v1114 = vadd.f32 %v1086, %v1113
        %1115 = vmatmul.f32.gmra.mxu0 %v1058
        %v1116 = vpop.f32.mrf.mxu0
        %v1117 = vadd.f32 %v1086, %v1116
        %1118 = vmatmul.f32.gmra.mxu0 %v1059
        %v1119 = vpop.f32.mrf.mxu0
        %v1120 = vadd.f32 %v1086, %v1119
        %1121 = vmatmul.f32.gmra.mxu0 %v1060
        %v1122 = vpop.f32.mrf.mxu0
        %v1123 = vadd.f32 %v1086, %v1122
        %1124 = vmatmul.f32.gmra.mxu0 %v1061
        %v1125 = vpop.f32.mrf.mxu0
        %v1126 = vadd.f32 %v1086, %v1125
        %1127 = vmatmul.f32.gmra.mxu0 %v1062
        %v1128 = vpop.f32.mrf.mxu0
        %v1129 = vadd.f32 %v1086, %v1128
        %1130 = vmatmul.f32.gmra.mxu0 %v1063
        %v1131 = vpop.f32.mrf.mxu0
        %v1132 = vadd.f32 %v1086, %v1131
        %1133 = vmatmul.f32.gmra.mxu0 %v1064
        %v1134 = vpop.f32.mrf.mxu0
        %v1135 = vadd.f32 %v1086, %v1134
        %1136 = vmatmul.f32.gmra.mxu0 %v1065
        %v1137 = vpop.f32.mrf.mxu0
        %v1138 = vadd.f32 %v1086, %v1137
        %1139 = vmatmul.f32.gmra.mxu0 %v1066
        %v1140 = vpop.f32.mrf.mxu0
        %v1141 = vadd.f32 %v1086, %v1140
        %1142 = vmatmul.f32.gmra.mxu0 %v1067
        %v1143 = vpop.f32.mrf.mxu0
        %v1144 = vadd.f32 %v1086, %v1143
        %1145 = vmatmul.f32.gmra.mxu0 %v1068
        %v1146 = vpop.f32.mrf.mxu0
        %v1147 = vadd.f32 %v1086, %v1146
        %1148 = vmatmul.f32.gmra.mxu0 %v1069
        %v1149 = vpop.f32.mrf.mxu0
        %v1150 = vadd.f32 %v1086, %v1149
        %1151 = vmatmul.f32.gmra.mxu0 %v1070
        %v1152 = vpop.f32.mrf.mxu0
        %v1153 = vadd.f32 %v1086, %v1152
        %1154 = vmatmul.f32.gmra.mxu0 %v1071
        %v1155 = vpop.f32.mrf.mxu0
        %v1156 = vadd.f32 %v1086, %v1155
        %1157 = vmatmul.f32.gmra.mxu0 %v1072
        %v1158 = vpop.f32.mrf.mxu0
        %v1159 = vadd.f32 %v1086, %v1158
        %1160 = vmatmul.f32.gmra.mxu0 %v1073
        %v1161 = vpop.f32.mrf.mxu0
        %v1162 = vadd.f32 %v1086, %v1161
        %1163 = vmatmul.f32.gmra.mxu0 %v1074
        %v1164 = vpop.f32.mrf.mxu0
        %v1165 = vadd.f32 %v1086, %v1164
        %1166 = vmatmul.f32.gmra.mxu0 %v1075
        %v1167 = vpop.f32.mrf.mxu0
        %v1168 = vadd.f32 %v1086, %v1167
        %1169 = vmatmul.f32.gmra.mxu0 %v1076
        %v1170 = vpop.f32.mrf.mxu0
        %v1171 = vadd.f32 %v1086, %v1170
        %1172 = vmatmul.f32.gmra.mxu0 %v1077
        %v1173 = vpop.f32.mrf.mxu0
        %v1174 = vadd.f32 %v1086, %v1173
        %1175 = vmatmul.f32.gmra.mxu0 %v1078
        %v1176 = vpop.f32.mrf.mxu0
        %v1177 = vadd.f32 %v1086, %v1176
        %1178 = vmatmul.f32.gmra.mxu0 %v1079
        %v1179 = vpop.f32.mrf.mxu0
        %v1180 = vadd.f32 %v1086, %v1179
        %1181 = vmatmul.f32.gmra.mxu0 %v1080
        %v1182 = vpop.f32.mrf.mxu0
        %v1183 = vadd.f32 %v1086, %v1182
        %1184 = vmatmul.f32.gmra.mxu0 %v1081
        %v1185 = vpop.f32.mrf.mxu0
        %v1186 = vadd.f32 %v1086, %v1185
        %1187 = vmatmul.f32.gmra.mxu0 %v1082
        %v1188 = vpop.f32.mrf.mxu0
        %v1189 = vadd.f32 %v1086, %v1188
        %1190 = vmatmul.f32.gmra.mxu0 %v1083
        %v1191 = vpop.f32.mrf.mxu0
        %v1192 = vadd.f32 %v1086, %v1191
        %1193 = vmatmul.f32.gmra.mxu0 %v1084
        %v1194 = vpop.f32.mrf.mxu0
        %v1195 = vadd.f32 %v1086, %v1194
        %1196 = vmatmul.f32.gmra.mxu0 %v1085
        %v1197 = vpop.f32.mrf.mxu0
        %v1198 = vadd.f32 %v1086, %v1197
        %1199 = vdwg.mxu0
        %v1200 = vmax.f32 %v1105, 0.0
        %v1201 = vmax.f32 %v1108, 0.0
        %v1202 = vmax.f32 %v1111, 0.0
        %v1203 = vmax.f32 %v1114, 0.0
        %v1204 = vmax.f32 %v1117, 0.0
        %v1205 = vmax.f32 %v1120, 0.0
        %v1206 = vmax.f32 %v1123, 0.0
        %v1207 = vmax.f32 %v1126, 0.0
        %v1208 = vmax.f32 %v1129, 0.0
        %v1209 = vmax.f32 %v1132, 0.0
        %v1210 = vmax.f32 %v1135, 0.0
        %v1211 = vmax.f32 %v1138, 0.0
        %v1212 = vmax.f32 %v1141, 0.0
        %v1213 = vmax.f32 %v1144, 0.0
        %v1214 = vmax.f32 %v1147, 0.0
        %v1215 = vmax.f32 %v1150, 0.0
        %v1216 = vmax.f32 %v1153, 0.0
        %v1217 = vmax.f32 %v1156, 0.0
        %v1218 = vmax.f32 %v1159, 0.0
        %v1219 = vmax.f32 %v1162, 0.0
        %v1220 = vmax.f32 %v1165, 0.0
        %v1221 = vmax.f32 %v1168, 0.0
        %v1222 = vmax.f32 %v1171, 0.0
        %v1223 = vmax.f32 %v1174, 0.0
        %v1224 = vmax.f32 %v1177, 0.0
        %v1225 = vmax.f32 %v1180, 0.0
        %v1226 = vmax.f32 %v1183, 0.0
        %v1227 = vmax.f32 %v1186, 0.0
        %v1228 = vmax.f32 %v1189, 0.0
        %v1229 = vmax.f32 %v1192, 0.0
        %v1230 = vmax.f32 %v1195, 0.0
        %v1231 = vmax.f32 %v1198, 0.0
        %1264 = vrot.lane.b32.xlu0 %v1200, 35
        %v1265 = vpop.permute.xlu0 %1264
        %1266 = vrot.lane.b32.xlu0 %v1201, 35
        %v1267 = vpop.permute.xlu0 %1266
        %1268 = vrot.lane.b32.xlu0 %v1202, 35
        %v1269 = vpop.permute.xlu0 %1268
        %1270 = vrot.lane.b32.xlu0 %v1203, 35
        %v1271 = vpop.permute.xlu0 %1270
        %1272 = vrot.lane.b32.xlu0 %v1204, 35
        %v1273 = vpop.permute.xlu0 %1272
        %1274 = vrot.lane.b32.xlu0 %v1205, 35
        %v1275 = vpop.permute.xlu0 %1274
        %1276 = vrot.lane.b32.xlu0 %v1206, 35
        %v1277 = vpop.permute.xlu0 %1276
        %1278 = vrot.lane.b32.xlu0 %v1207, 35
        %v1279 = vpop.permute.xlu0 %1278
        %1280 = vrot.lane.b32.xlu0 %v1208, 35
        %v1281 = vpop.permute.xlu0 %1280
        %1282 = vrot.lane.b32.xlu0 %v1209, 35
        %v1283 = vpop.permute.xlu0 %1282
        %1284 = vrot.lane.b32.xlu0 %v1210, 35
        %v1285 = vpop.permute.xlu0 %1284
        %1286 = vrot.lane.b32.xlu0 %v1211, 35
        %v1287 = vpop.permute.xlu0 %1286
        %1288 = vrot.lane.b32.xlu0 %v1212, 35
        %v1289 = vpop.permute.xlu0 %1288
        %1290 = vrot.lane.b32.xlu0 %v1213, 35
        %v1291 = vpop.permute.xlu0 %1290
        %1292 = vrot.lane.b32.xlu0 %v1214, 35
        %v1293 = vpop.permute.xlu0 %1292
        %1294 = vrot.lane.b32.xlu0 %v1215, 35
        %v1295 = vpop.permute.xlu0 %1294
        %1296 = vrot.lane.b32.xlu0 %v1216, 35
        %v1297 = vpop.permute.xlu0 %1296
        %1298 = vrot.lane.b32.xlu0 %v1217, 35
        %v1299 = vpop.permute.xlu0 %1298
        %1300 = vrot.lane.b32.xlu0 %v1218, 35
        %v1301 = vpop.permute.xlu0 %1300
        %1302 = vrot.lane.b32.xlu0 %v1219, 35
        %v1303 = vpop.permute.xlu0 %1302
        %1304 = vrot.lane.b32.xlu0 %v1220, 35
        %v1305 = vpop.permute.xlu0 %1304
        %1306 = vrot.lane.b32.xlu0 %v1221, 35
        %v1307 = vpop.permute.xlu0 %1306
        %1308 = vrot.lane.b32.xlu0 %v1222, 35
        %v1309 = vpop.permute.xlu0 %1308
        %1310 = vrot.lane.b32.xlu0 %v1223, 35
        %v1311 = vpop.permute.xlu0 %1310
        %1312 = vrot.lane.b32.xlu0 %v1224, 35
        %v1313 = vpop.permute.xlu0 %1312
        %1314 = vrot.lane.b32.xlu0 %v1225, 35
        %v1315 = vpop.permute.xlu0 %1314
        %1316 = vrot.lane.b32.xlu0 %v1226, 35
        %v1317 = vpop.permute.xlu0 %1316
        %1318 = vrot.lane.b32.xlu0 %v1227, 35
        %v1319 = vpop.permute.xlu0 %1318
        %1320 = vrot.lane.b32.xlu0 %v1228, 35
        %v1321 = vpop.permute.xlu0 %1320
        %1322 = vrot.lane.b32.xlu0 %v1229, 35
        %v1323 = vpop.permute.xlu0 %1322
        %1324 = vrot.lane.b32.xlu0 %v1230, 35
        %v1325 = vpop.permute.xlu0 %1324
        %1326 = vrot.lane.b32.xlu0 %v1231, 35
        %v1327 = vpop.permute.xlu0 %1326
        %vm1360 = vcmask 367896
        %1361 = vst.msk [vmem:[#allocation2] sm:$0xff] %vm1360, %v1265
        %1362 = vst.msk [vmem:[#allocation2 + $0x8] sm:$0xff] %vm1360, %v1267
        %1363 = vst.msk [vmem:[#allocation2 + $0x10] sm:$0xff] %vm1360, %v1269
        %1364 = vst.msk [vmem:[#allocation2 + $0x18] sm:$0xff] %vm1360, %v1271
        %1365 = vst.msk [vmem:[#allocation2 + $0x20] sm:$0xff] %vm1360, %v1273
        %1366 = vst.msk [vmem:[#allocation2 + $0x28] sm:$0xff] %vm1360, %v1275
        %1367 = vst.msk [vmem:[#allocation2 + $0x30] sm:$0xff] %vm1360, %v1277
        %1368 = vst.msk [vmem:[#allocation2 + $0x38] sm:$0xff] %vm1360, %v1279
        %1369 = vst.msk [vmem:[#allocation2 + $0x40] sm:$0xff] %vm1360, %v1281
        %1370 = vst.msk [vmem:[#allocation2 + $0x48] sm:$0xff] %vm1360, %v1283
        %1371 = vst.msk [vmem:[#allocation2 + $0x50] sm:$0xff] %vm1360, %v1285
        %1372 = vst.msk [vmem:[#allocation2 + $0x58] sm:$0xff] %vm1360, %v1287
        %1373 = vst.msk [vmem:[#allocation2 + $0x60] sm:$0xff] %vm1360, %v1289
        %1374 = vst.msk [vmem:[#allocation2 + $0x68] sm:$0xff] %vm1360, %v1291
        %1375 = vst.msk [vmem:[#allocation2 + $0x70] sm:$0xff] %vm1360, %v1293
        %1376 = vst.msk [vmem:[#allocation2 + $0x78] sm:$0xff] %vm1360, %v1295
        %1377 = vst.msk [vmem:[#allocation2 + $0x80] sm:$0xff] %vm1360, %v1297
        %1378 = vst.msk [vmem:[#allocation2 + $0x88] sm:$0xff] %vm1360, %v1299
        %1379 = vst.msk [vmem:[#allocation2 + $0x90] sm:$0xff] %vm1360, %v1301
        %1380 = vst.msk [vmem:[#allocation2 + $0x98] sm:$0xff] %vm1360, %v1303
        %1381 = vst.msk [vmem:[#allocation2 + $0xa0] sm:$0xff] %vm1360, %v1305
        %1382 = vst.msk [vmem:[#allocation2 + $0xa8] sm:$0xff] %vm1360, %v1307
        %1383 = vst.msk [vmem:[#allocation2 + $0xb0] sm:$0xff] %vm1360, %v1309
        %1384 = vst.msk [vmem:[#allocation2 + $0xb8] sm:$0xff] %vm1360, %v1311
        %1385 = vst.msk [vmem:[#allocation2 + $0xc0] sm:$0xff] %vm1360, %v1313
        %1386 = vst.msk [vmem:[#allocation2 + $0xc8] sm:$0xff] %vm1360, %v1315
        %1387 = vst.msk [vmem:[#allocation2 + $0xd0] sm:$0xff] %vm1360, %v1317
        %1388 = vst.msk [vmem:[#allocation2 + $0xd8] sm:$0xff] %vm1360, %v1319
        %1389 = vst.msk [vmem:[#allocation2 + $0xe0] sm:$0xff] %vm1360, %v1321
        %1390 = vst.msk [vmem:[#allocation2 + $0xe8] sm:$0xff] %vm1360, %v1323
        %1391 = vst.msk [vmem:[#allocation2 + $0xf0] sm:$0xff] %vm1360, %v1325
        %1392 = vst.msk [vmem:[#allocation2 + $0xf8] sm:$0xff] %vm1360, %v1327
        %s1393 = scalar_lea.vmem %s1, 384
        %v1394 = vld [vmem:[%s1393] sm:$0xff]
        %v1395 = vld [vmem:[%s1393 + $0x8] sm:$0xff]
        %v1396 = vld [vmem:[%s1393 + $0x10] sm:$0xff]
        %v1397 = vld [vmem:[%s1393 + $0x18] sm:$0xff]
        %v1398 = vld [vmem:[%s1393 + $0x20] sm:$0xff]
        %v1399 = vld [vmem:[%s1393 + $0x28] sm:$0xff]
        %v1400 = vld [vmem:[%s1393 + $0x30] sm:$0xff]
        %v1401 = vld [vmem:[%s1393 + $0x38] sm:$0xff]
        %v1402 = vld [vmem:[%s1393 + $0x40] sm:$0xff]
        %v1403 = vld [vmem:[%s1393 + $0x48] sm:$0xff]
        %v1404 = vld [vmem:[%s1393 + $0x50] sm:$0xff]
        %v1405 = vld [vmem:[%s1393 + $0x58] sm:$0xff]
        %v1406 = vld [vmem:[%s1393 + $0x60] sm:$0xff]
        %v1407 = vld [vmem:[%s1393 + $0x68] sm:$0xff]
        %v1408 = vld [vmem:[%s1393 + $0x70] sm:$0xff]
        %v1409 = vld [vmem:[%s1393 + $0x78] sm:$0xff]
        %v1410 = vld [vmem:[#allocation2] sm:$0xff]
        %v1411 = vld [vmem:[#allocation2 + $0x8] sm:$0xff]
        %v1412 = vld [vmem:[#allocation2 + $0x10] sm:$0xff]
        %v1413 = vld [vmem:[#allocation2 + $0x18] sm:$0xff]
        %v1414 = vld [vmem:[#allocation2 + $0x20] sm:$0xff]
        %v1415 = vld [vmem:[#allocation2 + $0x28] sm:$0xff]
        %v1416 = vld [vmem:[#allocation2 + $0x30] sm:$0xff]
        %v1417 = vld [vmem:[#allocation2 + $0x38] sm:$0xff]
        %v1418 = vld [vmem:[#allocation2 + $0x40] sm:$0xff]
        %v1419 = vld [vmem:[#allocation2 + $0x48] sm:$0xff]
        %v1420 = vld [vmem:[#allocation2 + $0x50] sm:$0xff]
        %v1421 = vld [vmem:[#allocation2 + $0x58] sm:$0xff]
        %v1422 = vld [vmem:[#allocation2 + $0x60] sm:$0xff]
        %v1423 = vld [vmem:[#allocation2 + $0x68] sm:$0xff]
        %v1424 = vld [vmem:[#allocation2 + $0x70] sm:$0xff]
        %v1425 = vld [vmem:[#allocation2 + $0x78] sm:$0xff]
        %v1426 = vld [vmem:[#allocation2 + $0x80] sm:$0xff]
        %v1427 = vld [vmem:[#allocation2 + $0x88] sm:$0xff]
        %v1428 = vld [vmem:[#allocation2 + $0x90] sm:$0xff]
        %v1429 = vld [vmem:[#allocation2 + $0x98] sm:$0xff]
        %v1430 = vld [vmem:[#allocation2 + $0xa0] sm:$0xff]
        %v1431 = vld [vmem:[#allocation2 + $0xa8] sm:$0xff]
        %v1432 = vld [vmem:[#allocation2 + $0xb0] sm:$0xff]
        %v1433 = vld [vmem:[#allocation2 + $0xb8] sm:$0xff]
        %v1434 = vld [vmem:[#allocation2 + $0xc0] sm:$0xff]
        %v1435 = vld [vmem:[#allocation2 + $0xc8] sm:$0xff]
        %v1436 = vld [vmem:[#allocation2 + $0xd0] sm:$0xff]
        %v1437 = vld [vmem:[#allocation2 + $0xd8] sm:$0xff]
        %v1438 = vld [vmem:[#allocation2 + $0xe0] sm:$0xff]
        %v1439 = vld [vmem:[#allocation2 + $0xe8] sm:$0xff]
        %v1440 = vld [vmem:[#allocation2 + $0xf0] sm:$0xff]
        %v1441 = vld [vmem:[#allocation2 + $0xf8] sm:$0xff]
        %v1442 = vperm.slane %v325, 3
        %1443 = vmatpush.msra.mxu0 %v1409
        %1444 = vmatpush.msra.mxu0 %v1408
        %1445 = vmatpush.msra.mxu0 %v1407
        %1446 = vmatpush.msra.mxu0 %v1406
        %1447 = vmatpush.msra.mxu0 %v1405
        %1448 = vmatpush.msra.mxu0 %v1404
        %1449 = vmatpush.msra.mxu0 %v1403
        %1450 = vmatpush.msra.mxu0 %v1402
        %1451 = vmatpush.msra.mxu0 %v1401
        %1452 = vmatpush.msra.mxu0 %v1400
        %1453 = vmatpush.msra.mxu0 %v1399
        %1454 = vmatpush.msra.mxu0 %v1398
        %1455 = vmatpush.msra.mxu0 %v1397
        %1456 = vmatpush.msra.mxu0 %v1396
        %1457 = vmatpush.msra.mxu0 %v1395
        %1458 = vmatpush.msra.mxu0 %v1394
        %1459 = vmatmul.f32.gmra.mxu0 %v1410
        %v1460 = vpop.f32.mrf.mxu0
        %v1461 = vadd.f32 %v1442, %v1460
        %1462 = vmatmul.f32.gmra.mxu0 %v1411
        %v1463 = vpop.f32.mrf.mxu0
        %v1464 = vadd.f32 %v1442, %v1463
        %1465 = vmatmul.f32.gmra.mxu0 %v1412
        %v1466 = vpop.f32.mrf.mxu0
        %v1467 = vadd.f32 %v1442, %v1466
        %1468 = vmatmul.f32.gmra.mxu0 %v1413
        %v1469 = vpop.f32.mrf.mxu0
        %v1470 = vadd.f32 %v1442, %v1469
        %1471 = vmatmul.f32.gmra.mxu0 %v1414
        %v1472 = vpop.f32.mrf.mxu0
        %v1473 = vadd.f32 %v1442, %v1472
        %1474 = vmatmul.f32.gmra.mxu0 %v1415
        %v1475 = vpop.f32.mrf.mxu0
        %v1476 = vadd.f32 %v1442, %v1475
        %1477 = vmatmul.f32.gmra.mxu0 %v1416
        %v1478 = vpop.f32.mrf.mxu0
        %v1479 = vadd.f32 %v1442, %v1478
        %1480 = vmatmul.f32.gmra.mxu0 %v1417
        %v1481 = vpop.f32.mrf.mxu0
        %v1482 = vadd.f32 %v1442, %v1481
        %1483 = vmatmul.f32.gmra.mxu0 %v1418
        %v1484 = vpop.f32.mrf.mxu0
        %v1485 = vadd.f32 %v1442, %v1484
        %1486 = vmatmul.f32.gmra.mxu0 %v1419
        %v1487 = vpop.f32.mrf.mxu0
        %v1488 = vadd.f32 %v1442, %v1487
        %1489 = vmatmul.f32.gmra.mxu0 %v1420
        %v1490 = vpop.f32.mrf.mxu0
        %v1491 = vadd.f32 %v1442, %v1490
        %1492 = vmatmul.f32.gmra.mxu0 %v1421
        %v1493 = vpop.f32.mrf.mxu0
        %v1494 = vadd.f32 %v1442, %v1493
        %1495 = vmatmul.f32.gmra.mxu0 %v1422
        %v1496 = vpop.f32.mrf.mxu0
        %v1497 = vadd.f32 %v1442, %v1496
        %1498 = vmatmul.f32.gmra.mxu0 %v1423
        %v1499 = vpop.f32.mrf.mxu0
        %v1500 = vadd.f32 %v1442, %v1499
        %1501 = vmatmul.f32.gmra.mxu0 %v1424
        %v1502 = vpop.f32.mrf.mxu0
        %v1503 = vadd.f32 %v1442, %v1502
        %1504 = vmatmul.f32.gmra.mxu0 %v1425
        %v1505 = vpop.f32.mrf.mxu0
        %v1506 = vadd.f32 %v1442, %v1505
        %1507 = vmatmul.f32.gmra.mxu0 %v1426
        %v1508 = vpop.f32.mrf.mxu0
        %v1509 = vadd.f32 %v1442, %v1508
        %1510 = vmatmul.f32.gmra.mxu0 %v1427
        %v1511 = vpop.f32.mrf.mxu0
        %v1512 = vadd.f32 %v1442, %v1511
        %1513 = vmatmul.f32.gmra.mxu0 %v1428
        %v1514 = vpop.f32.mrf.mxu0
        %v1515 = vadd.f32 %v1442, %v1514
        %1516 = vmatmul.f32.gmra.mxu0 %v1429
        %v1517 = vpop.f32.mrf.mxu0
        %v1518 = vadd.f32 %v1442, %v1517
        %1519 = vmatmul.f32.gmra.mxu0 %v1430
        %v1520 = vpop.f32.mrf.mxu0
        %v1521 = vadd.f32 %v1442, %v1520
        %1522 = vmatmul.f32.gmra.mxu0 %v1431
        %v1523 = vpop.f32.mrf.mxu0
        %v1524 = vadd.f32 %v1442, %v1523
        %1525 = vmatmul.f32.gmra.mxu0 %v1432
        %v1526 = vpop.f32.mrf.mxu0
        %v1527 = vadd.f32 %v1442, %v1526
        %1528 = vmatmul.f32.gmra.mxu0 %v1433
        %v1529 = vpop.f32.mrf.mxu0
        %v1530 = vadd.f32 %v1442, %v1529
        %1531 = vmatmul.f32.gmra.mxu0 %v1434
        %v1532 = vpop.f32.mrf.mxu0
        %v1533 = vadd.f32 %v1442, %v1532
        %1534 = vmatmul.f32.gmra.mxu0 %v1435
        %v1535 = vpop.f32.mrf.mxu0
        %v1536 = vadd.f32 %v1442, %v1535
        %1537 = vmatmul.f32.gmra.mxu0 %v1436
        %v1538 = vpop.f32.mrf.mxu0
        %v1539 = vadd.f32 %v1442, %v1538
        %1540 = vmatmul.f32.gmra.mxu0 %v1437
        %v1541 = vpop.f32.mrf.mxu0
        %v1542 = vadd.f32 %v1442, %v1541
        %1543 = vmatmul.f32.gmra.mxu0 %v1438
        %v1544 = vpop.f32.mrf.mxu0
        %v1545 = vadd.f32 %v1442, %v1544
        %1546 = vmatmul.f32.gmra.mxu0 %v1439
        %v1547 = vpop.f32.mrf.mxu0
        %v1548 = vadd.f32 %v1442, %v1547
        %1549 = vmatmul.f32.gmra.mxu0 %v1440
        %v1550 = vpop.f32.mrf.mxu0
        %v1551 = vadd.f32 %v1442, %v1550
        %1552 = vmatmul.f32.gmra.mxu0 %v1441
        %v1553 = vpop.f32.mrf.mxu0
        %v1554 = vadd.f32 %v1442, %v1553
        %1555 = vdwg.mxu0
        %v1556 = vmax.f32 %v1461, 0.0
        %v1557 = vmax.f32 %v1464, 0.0
        %v1558 = vmax.f32 %v1467, 0.0
        %v1559 = vmax.f32 %v1470, 0.0
        %v1560 = vmax.f32 %v1473, 0.0
        %v1561 = vmax.f32 %v1476, 0.0
        %v1562 = vmax.f32 %v1479, 0.0
        %v1563 = vmax.f32 %v1482, 0.0
        %v1564 = vmax.f32 %v1485, 0.0
        %v1565 = vmax.f32 %v1488, 0.0
        %v1566 = vmax.f32 %v1491, 0.0
        %v1567 = vmax.f32 %v1494, 0.0
        %v1568 = vmax.f32 %v1497, 0.0
        %v1569 = vmax.f32 %v1500, 0.0
        %v1570 = vmax.f32 %v1503, 0.0
        %v1571 = vmax.f32 %v1506, 0.0
        %v1572 = vmax.f32 %v1509, 0.0
        %v1573 = vmax.f32 %v1512, 0.0
        %v1574 = vmax.f32 %v1515, 0.0
        %v1575 = vmax.f32 %v1518, 0.0
        %v1576 = vmax.f32 %v1521, 0.0
        %v1577 = vmax.f32 %v1524, 0.0
        %v1578 = vmax.f32 %v1527, 0.0
        %v1579 = vmax.f32 %v1530, 0.0
        %v1580 = vmax.f32 %v1533, 0.0
        %v1581 = vmax.f32 %v1536, 0.0
        %v1582 = vmax.f32 %v1539, 0.0
        %v1583 = vmax.f32 %v1542, 0.0
        %v1584 = vmax.f32 %v1545, 0.0
        %v1585 = vmax.f32 %v1548, 0.0
        %v1586 = vmax.f32 %v1551, 0.0
        %v1587 = vmax.f32 %v1554, 0.0
        %1620 = vrot.lane.b32.xlu0 %v1556, 45
        %v1621 = vpop.permute.xlu0 %1620
        %1622 = vrot.lane.b32.xlu0 %v1557, 45
        %v1623 = vpop.permute.xlu0 %1622
        %1624 = vrot.lane.b32.xlu0 %v1558, 45
        %v1625 = vpop.permute.xlu0 %1624
        %1626 = vrot.lane.b32.xlu0 %v1559, 45
        %v1627 = vpop.permute.xlu0 %1626
        %1628 = vrot.lane.b32.xlu0 %v1560, 45
        %v1629 = vpop.permute.xlu0 %1628
        %1630 = vrot.lane.b32.xlu0 %v1561, 45
        %v1631 = vpop.permute.xlu0 %1630
        %1632 = vrot.lane.b32.xlu0 %v1562, 45
        %v1633 = vpop.permute.xlu0 %1632
        %1634 = vrot.lane.b32.xlu0 %v1563, 45
        %v1635 = vpop.permute.xlu0 %1634
        %1636 = vrot.lane.b32.xlu0 %v1564, 45
        %v1637 = vpop.permute.xlu0 %1636
        %1638 = vrot.lane.b32.xlu0 %v1565, 45
        %v1639 = vpop.permute.xlu0 %1638
        %1640 = vrot.lane.b32.xlu0 %v1566, 45
        %v1641 = vpop.permute.xlu0 %1640
        %1642 = vrot.lane.b32.xlu0 %v1567, 45
        %v1643 = vpop.permute.xlu0 %1642
        %1644 = vrot.lane.b32.xlu0 %v1568, 45
        %v1645 = vpop.permute.xlu0 %1644
        %1646 = vrot.lane.b32.xlu0 %v1569, 45
        %v1647 = vpop.permute.xlu0 %1646
        %1648 = vrot.lane.b32.xlu0 %v1570, 45
        %v1649 = vpop.permute.xlu0 %1648
        %1650 = vrot.lane.b32.xlu0 %v1571, 45
        %v1651 = vpop.permute.xlu0 %1650
        %1652 = vrot.lane.b32.xlu0 %v1572, 45
        %v1653 = vpop.permute.xlu0 %1652
        %1654 = vrot.lane.b32.xlu0 %v1573, 45
        %v1655 = vpop.permute.xlu0 %1654
        %1656 = vrot.lane.b32.xlu0 %v1574, 45
        %v1657 = vpop.permute.xlu0 %1656
        %1658 = vrot.lane.b32.xlu0 %v1575, 45
        %v1659 = vpop.permute.xlu0 %1658
        %1660 = vrot.lane.b32.xlu0 %v1576, 45
        %v1661 = vpop.permute.xlu0 %1660
        %1662 = vrot.lane.b32.xlu0 %v1577, 45
        %v1663 = vpop.permute.xlu0 %1662
        %1664 = vrot.lane.b32.xlu0 %v1578, 45
        %v1665 = vpop.permute.xlu0 %1664
        %1666 = vrot.lane.b32.xlu0 %v1579, 45
        %v1667 = vpop.permute.xlu0 %1666
        %1668 = vrot.lane.b32.xlu0 %v1580, 45
        %v1669 = vpop.permute.xlu0 %1668
        %1670 = vrot.lane.b32.xlu0 %v1581, 45
        %v1671 = vpop.permute.xlu0 %1670
        %1672 = vrot.lane.b32.xlu0 %v1582, 45
        %v1673 = vpop.permute.xlu0 %1672
        %1674 = vrot.lane.b32.xlu0 %v1583, 45
        %v1675 = vpop.permute.xlu0 %1674
        %1676 = vrot.lane.b32.xlu0 %v1584, 45
        %v1677 = vpop.permute.xlu0 %1676
        %1678 = vrot.lane.b32.xlu0 %v1585, 45
        %v1679 = vpop.permute.xlu0 %1678
        %1680 = vrot.lane.b32.xlu0 %v1586, 45
        %v1681 = vpop.permute.xlu0 %1680
        %1682 = vrot.lane.b32.xlu0 %v1587, 45
        %v1683 = vpop.permute.xlu0 %1682
        %vm1716 = vcmask 449896
        %1717 = vst.msk [vmem:[#allocation2] sm:$0xff] %vm1716, %v1621
        %1718 = vst.msk [vmem:[#allocation2 + $0x8] sm:$0xff] %vm1716, %v1623
        %1719 = vst.msk [vmem:[#allocation2 + $0x10] sm:$0xff] %vm1716, %v1625
        %1720 = vst.msk [vmem:[#allocation2 + $0x18] sm:$0xff] %vm1716, %v1627
        %1721 = vst.msk [vmem:[#allocation2 + $0x20] sm:$0xff] %vm1716, %v1629
        %1722 = vst.msk [vmem:[#allocation2 + $0x28] sm:$0xff] %vm1716, %v1631
        %1723 = vst.msk [vmem:[#allocation2 + $0x30] sm:$0xff] %vm1716, %v1633
        %1724 = vst.msk [vmem:[#allocation2 + $0x38] sm:$0xff] %vm1716, %v1635
        %1725 = vst.msk [vmem:[#allocation2 + $0x40] sm:$0xff] %vm1716, %v1637
        %1726 = vst.msk [vmem:[#allocation2 + $0x48] sm:$0xff] %vm1716, %v1639
        %1727 = vst.msk [vmem:[#allocation2 + $0x50] sm:$0xff] %vm1716, %v1641
        %1728 = vst.msk [vmem:[#allocation2 + $0x58] sm:$0xff] %vm1716, %v1643
        %1729 = vst.msk [vmem:[#allocation2 + $0x60] sm:$0xff] %vm1716, %v1645
        %1730 = vst.msk [vmem:[#allocation2 + $0x68] sm:$0xff] %vm1716, %v1647
        %1731 = vst.msk [vmem:[#allocation2 + $0x70] sm:$0xff] %vm1716, %v1649
        %1732 = vst.msk [vmem:[#allocation2 + $0x78] sm:$0xff] %vm1716, %v1651
        %1733 = vst.msk [vmem:[#allocation2 + $0x80] sm:$0xff] %vm1716, %v1653
        %1734 = vst.msk [vmem:[#allocation2 + $0x88] sm:$0xff] %vm1716, %v1655
        %1735 = vst.msk [vmem:[#allocation2 + $0x90] sm:$0xff] %vm1716, %v1657
        %1736 = vst.msk [vmem:[#allocation2 + $0x98] sm:$0xff] %vm1716, %v1659
        %1737 = vst.msk [vmem:[#allocation2 + $0xa0] sm:$0xff] %vm1716, %v1661
        %1738 = vst.msk [vmem:[#allocation2 + $0xa8] sm:$0xff] %vm1716, %v1663
        %1739 = vst.msk [vmem:[#allocation2 + $0xb0] sm:$0xff] %vm1716, %v1665
        %1740 = vst.msk [vmem:[#allocation2 + $0xb8] sm:$0xff] %vm1716, %v1667
        %1741 = vst.msk [vmem:[#allocation2 + $0xc0] sm:$0xff] %vm1716, %v1669
        %1742 = vst.msk [vmem:[#allocation2 + $0xc8] sm:$0xff] %vm1716, %v1671
        %1743 = vst.msk [vmem:[#allocation2 + $0xd0] sm:$0xff] %vm1716, %v1673
        %1744 = vst.msk [vmem:[#allocation2 + $0xd8] sm:$0xff] %vm1716, %v1675
        %1745 = vst.msk [vmem:[#allocation2 + $0xe0] sm:$0xff] %vm1716, %v1677
        %1746 = vst.msk [vmem:[#allocation2 + $0xe8] sm:$0xff] %vm1716, %v1679
        %1747 = vst.msk [vmem:[#allocation2 + $0xf0] sm:$0xff] %vm1716, %v1681
        %1748 = vst.msk [vmem:[#allocation2 + $0xf8] sm:$0xff] %vm1716, %v1683
        %s1749 = scalar_lea.vmem %s1, 512
        %v1750 = vld [vmem:[%s1749] sm:$0xff]
        %v1751 = vld [vmem:[%s1749 + $0x8] sm:$0xff]
        %v1752 = vld [vmem:[%s1749 + $0x10] sm:$0xff]
        %v1753 = vld [vmem:[%s1749 + $0x18] sm:$0xff]
        %v1754 = vld [vmem:[%s1749 + $0x20] sm:$0xff]
        %v1755 = vld [vmem:[%s1749 + $0x28] sm:$0xff]
        %v1756 = vld [vmem:[%s1749 + $0x30] sm:$0xff]
        %v1757 = vld [vmem:[%s1749 + $0x38] sm:$0xff]
        %v1758 = vld [vmem:[%s1749 + $0x40] sm:$0xff]
        %v1759 = vld [vmem:[%s1749 + $0x48] sm:$0xff]
        %v1760 = vld [vmem:[%s1749 + $0x50] sm:$0xff]
        %v1761 = vld [vmem:[%s1749 + $0x58] sm:$0xff]
        %v1762 = vld [vmem:[%s1749 + $0x60] sm:$0xff]
        %v1763 = vld [vmem:[%s1749 + $0x68] sm:$0xff]
        %v1764 = vld [vmem:[%s1749 + $0x70] sm:$0xff]
        %v1765 = vld [vmem:[%s1749 + $0x78] sm:$0xff]
        %v1766 = vld [vmem:[#allocation2] sm:$0xff]
        %v1767 = vld [vmem:[#allocation2 + $0x8] sm:$0xff]
        %v1768 = vld [vmem:[#allocation2 + $0x10] sm:$0xff]
        %v1769 = vld [vmem:[#allocation2 + $0x18] sm:$0xff]
        %v1770 = vld [vmem:[#allocation2 + $0x20] sm:$0xff]
        %v1771 = vld [vmem:[#allocation2 + $0x28] sm:$0xff]
        %v1772 = vld [vmem:[#allocation2 + $0x30] sm:$0xff]
        %v1773 = vld [vmem:[#allocation2 + $0x38] sm:$0xff]
        %v1774 = vld [vmem:[#allocation2 + $0x40] sm:$0xff]
        %v1775 = vld [vmem:[#allocation2 + $0x48] sm:$0xff]
        %v1776 = vld [vmem:[#allocation2 + $0x50] sm:$0xff]
        %v1777 = vld [vmem:[#allocation2 + $0x58] sm:$0xff]
        %v1778 = vld [vmem:[#allocation2 + $0x60] sm:$0xff]
        %v1779 = vld [vmem:[#allocation2 + $0x68] sm:$0xff]
        %v1780 = vld [vmem:[#allocation2 + $0x70] sm:$0xff]
        %v1781 = vld [vmem:[#allocation2 + $0x78] sm:$0xff]
        %v1782 = vld [vmem:[#allocation2 + $0x80] sm:$0xff]
        %v1783 = vld [vmem:[#allocation2 + $0x88] sm:$0xff]
        %v1784 = vld [vmem:[#allocation2 + $0x90] sm:$0xff]
        %v1785 = vld [vmem:[#allocation2 + $0x98] sm:$0xff]
        %v1786 = vld [vmem:[#allocation2 + $0xa0] sm:$0xff]
        %v1787 = vld [vmem:[#allocation2 + $0xa8] sm:$0xff]
        %v1788 = vld [vmem:[#allocation2 + $0xb0] sm:$0xff]
        %v1789 = vld [vmem:[#allocation2 + $0xb8] sm:$0xff]
        %v1790 = vld [vmem:[#allocation2 + $0xc0] sm:$0xff]
        %v1791 = vld [vmem:[#allocation2 + $0xc8] sm:$0xff]
        %v1792 = vld [vmem:[#allocation2 + $0xd0] sm:$0xff]
        %v1793 = vld [vmem:[#allocation2 + $0xd8] sm:$0xff]
        %v1794 = vld [vmem:[#allocation2 + $0xe0] sm:$0xff]
        %v1795 = vld [vmem:[#allocation2 + $0xe8] sm:$0xff]
        %v1796 = vld [vmem:[#allocation2 + $0xf0] sm:$0xff]
        %v1797 = vld [vmem:[#allocation2 + $0xf8] sm:$0xff]
        %v1798 = vperm.slane %v325, 4
        %1799 = vmatpush.msra.mxu0 %v1765
        %1800 = vmatpush.msra.mxu0 %v1764
        %1801 = vmatpush.msra.mxu0 %v1763
        %1802 = vmatpush.msra.mxu0 %v1762
        %1803 = vmatpush.msra.mxu0 %v1761
        %1804 = vmatpush.msra.mxu0 %v1760
        %1805 = vmatpush.msra.mxu0 %v1759
        %1806 = vmatpush.msra.mxu0 %v1758
        %1807 = vmatpush.msra.mxu0 %v1757
        %1808 = vmatpush.msra.mxu0 %v1756
        %1809 = vmatpush.msra.mxu0 %v1755
        %1810 = vmatpush.msra.mxu0 %v1754
        %1811 = vmatpush.msra.mxu0 %v1753
        %1812 = vmatpush.msra.mxu0 %v1752
        %1813 = vmatpush.msra.mxu0 %v1751
        %1814 = vmatpush.msra.mxu0 %v1750
        %1815 = vmatmul.f32.gmra.mxu0 %v1766
        %v1816 = vpop.f32.mrf.mxu0
        %v1817 = vadd.f32 %v1798, %v1816
        %1818 = vmatmul.f32.gmra.mxu0 %v1767
        %v1819 = vpop.f32.mrf.mxu0
        %v1820 = vadd.f32 %v1798, %v1819
        %1821 = vmatmul.f32.gmra.mxu0 %v1768
        %v1822 = vpop.f32.mrf.mxu0
        %v1823 = vadd.f32 %v1798, %v1822
        %1824 = vmatmul.f32.gmra.mxu0 %v1769
        %v1825 = vpop.f32.mrf.mxu0
        %v1826 = vadd.f32 %v1798, %v1825
        %1827 = vmatmul.f32.gmra.mxu0 %v1770
        %v1828 = vpop.f32.mrf.mxu0
        %v1829 = vadd.f32 %v1798, %v1828
        %1830 = vmatmul.f32.gmra.mxu0 %v1771
        %v1831 = vpop.f32.mrf.mxu0
        %v1832 = vadd.f32 %v1798, %v1831
        %1833 = vmatmul.f32.gmra.mxu0 %v1772
        %v1834 = vpop.f32.mrf.mxu0
        %v1835 = vadd.f32 %v1798, %v1834
        %1836 = vmatmul.f32.gmra.mxu0 %v1773
        %v1837 = vpop.f32.mrf.mxu0
        %v1838 = vadd.f32 %v1798, %v1837
        %1839 = vmatmul.f32.gmra.mxu0 %v1774
        %v1840 = vpop.f32.mrf.mxu0
        %v1841 = vadd.f32 %v1798, %v1840
        %1842 = vmatmul.f32.gmra.mxu0 %v1775
        %v1843 = vpop.f32.mrf.mxu0
        %v1844 = vadd.f32 %v1798, %v1843
        %1845 = vmatmul.f32.gmra.mxu0 %v1776
        %v1846 = vpop.f32.mrf.mxu0
        %v1847 = vadd.f32 %v1798, %v1846
        %1848 = vmatmul.f32.gmra.mxu0 %v1777
        %v1849 = vpop.f32.mrf.mxu0
        %v1850 = vadd.f32 %v1798, %v1849
        %1851 = vmatmul.f32.gmra.mxu0 %v1778
        %v1852 = vpop.f32.mrf.mxu0
        %v1853 = vadd.f32 %v1798, %v1852
        %1854 = vmatmul.f32.gmra.mxu0 %v1779
        %v1855 = vpop.f32.mrf.mxu0
        %v1856 = vadd.f32 %v1798, %v1855
        %1857 = vmatmul.f32.gmra.mxu0 %v1780
        %v1858 = vpop.f32.mrf.mxu0
        %v1859 = vadd.f32 %v1798, %v1858
        %1860 = vmatmul.f32.gmra.mxu0 %v1781
        %v1861 = vpop.f32.mrf.mxu0
        %v1862 = vadd.f32 %v1798, %v1861
        %1863 = vmatmul.f32.gmra.mxu0 %v1782
        %v1864 = vpop.f32.mrf.mxu0
        %v1865 = vadd.f32 %v1798, %v1864
        %1866 = vmatmul.f32.gmra.mxu0 %v1783
        %v1867 = vpop.f32.mrf.mxu0
        %v1868 = vadd.f32 %v1798, %v1867
        %1869 = vmatmul.f32.gmra.mxu0 %v1784
        %v1870 = vpop.f32.mrf.mxu0
        %v1871 = vadd.f32 %v1798, %v1870
        %1872 = vmatmul.f32.gmra.mxu0 %v1785
        %v1873 = vpop.f32.mrf.mxu0
        %v1874 = vadd.f32 %v1798, %v1873
        %1875 = vmatmul.f32.gmra.mxu0 %v1786
        %v1876 = vpop.f32.mrf.mxu0
        %v1877 = vadd.f32 %v1798, %v1876
        %1878 = vmatmul.f32.gmra.mxu0 %v1787
        %v1879 = vpop.f32.mrf.mxu0
        %v1880 = vadd.f32 %v1798, %v1879
        %1881 = vmatmul.f32.gmra.mxu0 %v1788
        %v1882 = vpop.f32.mrf.mxu0
        %v1883 = vadd.f32 %v1798, %v1882
        %1884 = vmatmul.f32.gmra.mxu0 %v1789
        %v1885 = vpop.f32.mrf.mxu0
        %v1886 = vadd.f32 %v1798, %v1885
        %1887 = vmatmul.f32.gmra.mxu0 %v1790
        %v1888 = vpop.f32.mrf.mxu0
        %v1889 = vadd.f32 %v1798, %v1888
        %1890 = vmatmul.f32.gmra.mxu0 %v1791
        %v1891 = vpop.f32.mrf.mxu0
        %v1892 = vadd.f32 %v1798, %v1891
        %1893 = vmatmul.f32.gmra.mxu0 %v1792
        %v1894 = vpop.f32.mrf.mxu0
        %v1895 = vadd.f32 %v1798, %v1894
        %1896 = vmatmul.f32.gmra.mxu0 %v1793
        %v1897 = vpop.f32.mrf.mxu0
        %v1898 = vadd.f32 %v1798, %v1897
        %1899 = vmatmul.f32.gmra.mxu0 %v1794
        %v1900 = vpop.f32.mrf.mxu0
        %v1901 = vadd.f32 %v1798, %v1900
        %1902 = vmatmul.f32.gmra.mxu0 %v1795
        %v1903 = vpop.f32.mrf.mxu0
        %v1904 = vadd.f32 %v1798, %v1903
        %1905 = vmatmul.f32.gmra.mxu0 %v1796
        %v1906 = vpop.f32.mrf.mxu0
        %v1907 = vadd.f32 %v1798, %v1906
        %1908 = vmatmul.f32.gmra.mxu0 %v1797
        %v1909 = vpop.f32.mrf.mxu0
        %v1910 = vadd.f32 %v1798, %v1909
        %1911 = vdwg.mxu0
        %v1912 = vmax.f32 %v1817, 0.0
        %v1913 = vmax.f32 %v1820, 0.0
        %v1914 = vmax.f32 %v1823, 0.0
        %v1915 = vmax.f32 %v1826, 0.0
        %v1916 = vmax.f32 %v1829, 0.0
        %v1917 = vmax.f32 %v1832, 0.0
        %v1918 = vmax.f32 %v1835, 0.0
        %v1919 = vmax.f32 %v1838, 0.0
        %v1920 = vmax.f32 %v1841, 0.0
        %v1921 = vmax.f32 %v1844, 0.0
        %v1922 = vmax.f32 %v1847, 0.0
        %v1923 = vmax.f32 %v1850, 0.0
        %v1924 = vmax.f32 %v1853, 0.0
        %v1925 = vmax.f32 %v1856, 0.0
        %v1926 = vmax.f32 %v1859, 0.0
        %v1927 = vmax.f32 %v1862, 0.0
        %v1928 = vmax.f32 %v1865, 0.0
        %v1929 = vmax.f32 %v1868, 0.0
        %v1930 = vmax.f32 %v1871, 0.0
        %v1931 = vmax.f32 %v1874, 0.0
        %v1932 = vmax.f32 %v1877, 0.0
        %v1933 = vmax.f32 %v1880, 0.0
        %v1934 = vmax.f32 %v1883, 0.0
        %v1935 = vmax.f32 %v1886, 0.0
        %v1936 = vmax.f32 %v1889, 0.0
        %v1937 = vmax.f32 %v1892, 0.0
        %v1938 = vmax.f32 %v1895, 0.0
        %v1939 = vmax.f32 %v1898, 0.0
        %v1940 = vmax.f32 %v1901, 0.0
        %v1941 = vmax.f32 %v1904, 0.0
        %v1942 = vmax.f32 %v1907, 0.0
        %v1943 = vmax.f32 %v1910, 0.0
        %1976 = vrot.lane.b32.xlu0 %v1912, 55
        %v1977 = vpop.permute.xlu0 %1976
        %1978 = vrot.lane.b32.xlu0 %v1913, 55
        %v1979 = vpop.permute.xlu0 %1978
        %1980 = vrot.lane.b32.xlu0 %v1914, 55
        %v1981 = vpop.permute.xlu0 %1980
        %1982 = vrot.lane.b32.xlu0 %v1915, 55
        %v1983 = vpop.permute.xlu0 %1982
        %1984 = vrot.lane.b32.xlu0 %v1916, 55
        %v1985 = vpop.permute.xlu0 %1984
        %1986 = vrot.lane.b32.xlu0 %v1917, 55
        %v1987 = vpop.permute.xlu0 %1986
        %1988 = vrot.lane.b32.xlu0 %v1918, 55
        %v1989 = vpop.permute.xlu0 %1988
        %1990 = vrot.lane.b32.xlu0 %v1919, 55
        %v1991 = vpop.permute.xlu0 %1990
        %1992 = vrot.lane.b32.xlu0 %v1920, 55
        %v1993 = vpop.permute.xlu0 %1992
        %1994 = vrot.lane.b32.xlu0 %v1921, 55
        %v1995 = vpop.permute.xlu0 %1994
        %1996 = vrot.lane.b32.xlu0 %v1922, 55
        %v1997 = vpop.permute.xlu0 %1996
        %1998 = vrot.lane.b32.xlu0 %v1923, 55
        %v1999 = vpop.permute.xlu0 %1998
        %2000 = vrot.lane.b32.xlu0 %v1924, 55
        %v2001 = vpop.permute.xlu0 %2000
        %2002 = vrot.lane.b32.xlu0 %v1925, 55
        %v2003 = vpop.permute.xlu0 %2002
        %2004 = vrot.lane.b32.xlu0 %v1926, 55
        %v2005 = vpop.permute.xlu0 %2004
        %2006 = vrot.lane.b32.xlu0 %v1927, 55
        %v2007 = vpop.permute.xlu0 %2006
        %2008 = vrot.lane.b32.xlu0 %v1928, 55
        %v2009 = vpop.permute.xlu0 %2008
        %2010 = vrot.lane.b32.xlu0 %v1929, 55
        %v2011 = vpop.permute.xlu0 %2010
        %2012 = vrot.lane.b32.xlu0 %v1930, 55
        %v2013 = vpop.permute.xlu0 %2012
        %2014 = vrot.lane.b32.xlu0 %v1931, 55
        %v2015 = vpop.permute.xlu0 %2014
        %2016 = vrot.lane.b32.xlu0 %v1932, 55
        %v2017 = vpop.permute.xlu0 %2016
        %2018 = vrot.lane.b32.xlu0 %v1933, 55
        %v2019 = vpop.permute.xlu0 %2018
        %2020 = vrot.lane.b32.xlu0 %v1934, 55
        %v2021 = vpop.permute.xlu0 %2020
        %2022 = vrot.lane.b32.xlu0 %v1935, 55
        %v2023 = vpop.permute.xlu0 %2022
        %2024 = vrot.lane.b32.xlu0 %v1936, 55
        %v2025 = vpop.permute.xlu0 %2024
        %2026 = vrot.lane.b32.xlu0 %v1937, 55
        %v2027 = vpop.permute.xlu0 %2026
        %2028 = vrot.lane.b32.xlu0 %v1938, 55
        %v2029 = vpop.permute.xlu0 %2028
        %2030 = vrot.lane.b32.xlu0 %v1939, 55
        %v2031 = vpop.permute.xlu0 %2030
        %2032 = vrot.lane.b32.xlu0 %v1940, 55
        %v2033 = vpop.permute.xlu0 %2032
        %2034 = vrot.lane.b32.xlu0 %v1941, 55
        %v2035 = vpop.permute.xlu0 %2034
        %2036 = vrot.lane.b32.xlu0 %v1942, 55
        %v2037 = vpop.permute.xlu0 %2036
        %2038 = vrot.lane.b32.xlu0 %v1943, 55
        %v2039 = vpop.permute.xlu0 %2038
        %vm2072 = vcmask 531896
        %2073 = vst.msk [vmem:[#allocation2] sm:$0xff] %vm2072, %v1977
        %2074 = vst.msk [vmem:[#allocation2 + $0x8] sm:$0xff] %vm2072, %v1979
        %2075 = vst.msk [vmem:[#allocation2 + $0x10] sm:$0xff] %vm2072, %v1981
        %2076 = vst.msk [vmem:[#allocation2 + $0x18] sm:$0xff] %vm2072, %v1983
        %2077 = vst.msk [vmem:[#allocation2 + $0x20] sm:$0xff] %vm2072, %v1985
        %2078 = vst.msk [vmem:[#allocation2 + $0x28] sm:$0xff] %vm2072, %v1987
        %2079 = vst.msk [vmem:[#allocation2 + $0x30] sm:$0xff] %vm2072, %v1989
        %2080 = vst.msk [vmem:[#allocation2 + $0x38] sm:$0xff] %vm2072, %v1991
        %2081 = vst.msk [vmem:[#allocation2 + $0x40] sm:$0xff] %vm2072, %v1993
        %2082 = vst.msk [vmem:[#allocation2 + $0x48] sm:$0xff] %vm2072, %v1995
        %2083 = vst.msk [vmem:[#allocation2 + $0x50] sm:$0xff] %vm2072, %v1997
        %2084 = vst.msk [vmem:[#allocation2 + $0x58] sm:$0xff] %vm2072, %v1999
        %2085 = vst.msk [vmem:[#allocation2 + $0x60] sm:$0xff] %vm2072, %v2001
        %2086 = vst.msk [vmem:[#allocation2 + $0x68] sm:$0xff] %vm2072, %v2003
        %2087 = vst.msk [vmem:[#allocation2 + $0x70] sm:$0xff] %vm2072, %v2005
        %2088 = vst.msk [vmem:[#allocation2 + $0x78] sm:$0xff] %vm2072, %v2007
        %2089 = vst.msk [vmem:[#allocation2 + $0x80] sm:$0xff] %vm2072, %v2009
        %2090 = vst.msk [vmem:[#allocation2 + $0x88] sm:$0xff] %vm2072, %v2011
        %2091 = vst.msk [vmem:[#allocation2 + $0x90] sm:$0xff] %vm2072, %v2013
        %2092 = vst.msk [vmem:[#allocation2 + $0x98] sm:$0xff] %vm2072, %v2015
        %2093 = vst.msk [vmem:[#allocation2 + $0xa0] sm:$0xff] %vm2072, %v2017
        %2094 = vst.msk [vmem:[#allocation2 + $0xa8] sm:$0xff] %vm2072, %v2019
        %2095 = vst.msk [vmem:[#allocation2 + $0xb0] sm:$0xff] %vm2072, %v2021
        %2096 = vst.msk [vmem:[#allocation2 + $0xb8] sm:$0xff] %vm2072, %v2023
        %2097 = vst.msk [vmem:[#allocation2 + $0xc0] sm:$0xff] %vm2072, %v2025
        %2098 = vst.msk [vmem:[#allocation2 + $0xc8] sm:$0xff] %vm2072, %v2027
        %2099 = vst.msk [vmem:[#allocation2 + $0xd0] sm:$0xff] %vm2072, %v2029
        %2100 = vst.msk [vmem:[#allocation2 + $0xd8] sm:$0xff] %vm2072, %v2031
        %2101 = vst.msk [vmem:[#allocation2 + $0xe0] sm:$0xff] %vm2072, %v2033
        %2102 = vst.msk [vmem:[#allocation2 + $0xe8] sm:$0xff] %vm2072, %v2035
        %2103 = vst.msk [vmem:[#allocation2 + $0xf0] sm:$0xff] %vm2072, %v2037
        %2104 = vst.msk [vmem:[#allocation2 + $0xf8] sm:$0xff] %vm2072, %v2039
        %v2105 = vld [vmem:[%s3] sm:$0x1]
        %v2106 = vld [vmem:[#allocation2] sm:$0xff]
        %v2107 = vld [vmem:[#allocation2 + $0x8] sm:$0xff]
        %v2108 = vld [vmem:[#allocation2 + $0x10] sm:$0xff]
        %v2109 = vld [vmem:[#allocation2 + $0x18] sm:$0xff]
        %v2110 = vld [vmem:[#allocation2 + $0x20] sm:$0xff]
        %v2111 = vld [vmem:[#allocation2 + $0x28] sm:$0xff]
        %v2112 = vld [vmem:[#allocation2 + $0x30] sm:$0xff]
        %v2113 = vld [vmem:[#allocation2 + $0x38] sm:$0xff]
        %v2114 = vld [vmem:[#allocation2 + $0x40] sm:$0xff]
        %v2115 = vld [vmem:[#allocation2 + $0x48] sm:$0xff]
        %v2116 = vld [vmem:[#allocation2 + $0x50] sm:$0xff]
        %v2117 = vld [vmem:[#allocation2 + $0x58] sm:$0xff]
        %v2118 = vld [vmem:[#allocation2 + $0x60] sm:$0xff]
        %v2119 = vld [vmem:[#allocation2 + $0x68] sm:$0xff]
        %v2120 = vld [vmem:[#allocation2 + $0x70] sm:$0xff]
        %v2121 = vld [vmem:[#allocation2 + $0x78] sm:$0xff]
        %v2122 = vld [vmem:[#allocation2 + $0x80] sm:$0xff]
        %v2123 = vld [vmem:[#allocation2 + $0x88] sm:$0xff]
        %v2124 = vld [vmem:[#allocation2 + $0x90] sm:$0xff]
        %v2125 = vld [vmem:[#allocation2 + $0x98] sm:$0xff]
        %v2126 = vld [vmem:[#allocation2 + $0xa0] sm:$0xff]
        %v2127 = vld [vmem:[#allocation2 + $0xa8] sm:$0xff]
        %v2128 = vld [vmem:[#allocation2 + $0xb0] sm:$0xff]
        %v2129 = vld [vmem:[#allocation2 + $0xb8] sm:$0xff]
        %v2130 = vld [vmem:[#allocation2 + $0xc0] sm:$0xff]
        %v2131 = vld [vmem:[#allocation2 + $0xc8] sm:$0xff]
        %v2132 = vld [vmem:[#allocation2 + $0xd0] sm:$0xff]
        %v2133 = vld [vmem:[#allocation2 + $0xd8] sm:$0xff]
        %v2134 = vld [vmem:[#allocation2 + $0xe0] sm:$0xff]
        %v2135 = vld [vmem:[#allocation2 + $0xe8] sm:$0xff]
        %v2136 = vld [vmem:[#allocation2 + $0xf0] sm:$0xff]
        %v2137 = vld [vmem:[#allocation2 + $0xf8] sm:$0xff]
        %v2138 = vld [vmem:[#allocation3] sm:$0x1]
        %2140 = vset.pattern.permute.xlu0 0
        %2141 = vperm.xlu0 %2140, %v2138
        %v2142 = vpop.permute.xlu0 %2141
        %v2144 = vperm.slane %v2142, 0
        %2145 = vmatpush.xpose.msra.mxu0 %v2121
        %2146 = vmatpush.xpose.msra.mxu0 %v2120
        %2147 = vmatpush.xpose.msra.mxu0 %v2119
        %2148 = vmatpush.xpose.msra.mxu0 %v2118
        %2149 = vmatpush.xpose.msra.mxu0 %v2117
        %2150 = vmatpush.xpose.msra.mxu0 %v2116
        %2151 = vmatpush.xpose.msra.mxu0 %v2115
        %2152 = vmatpush.xpose.msra.mxu0 %v2114
        %2153 = vmatpush.xpose.msra.mxu0 %v2113
        %2154 = vmatpush.xpose.msra.mxu0 %v2112
        %2155 = vmatpush.xpose.msra.mxu0 %v2111
        %2156 = vmatpush.xpose.msra.mxu0 %v2110
        %2157 = vmatpush.xpose.msra.mxu0 %v2109
        %2158 = vmatpush.xpose.msra.mxu0 %v2108
        %2159 = vmatpush.xpose.msra.mxu0 %v2107
        %2160 = vmatpush.xpose.msra.mxu0 %v2106
        %2161 = vmatmul.f32.gmra.mxu0 %v2105
        %v2162 = vpop.f32.mrf.mxu0
        %v2163 = vadd.f32 %v2144, %v2162
        %2164 = vdwg.mxu0
        %2165 = vmatpush.xpose.msra.mxu0 %v2137
        %2166 = vmatpush.xpose.msra.mxu0 %v2136
        %2167 = vmatpush.xpose.msra.mxu0 %v2135
        %2168 = vmatpush.xpose.msra.mxu0 %v2134
        %2169 = vmatpush.xpose.msra.mxu0 %v2133
        %2170 = vmatpush.xpose.msra.mxu0 %v2132
        %2171 = vmatpush.xpose.msra.mxu0 %v2131
        %2172 = vmatpush.xpose.msra.mxu0 %v2130
        %2173 = vmatpush.xpose.msra.mxu0 %v2129
        %2174 = vmatpush.xpose.msra.mxu0 %v2128
        %2175 = vmatpush.xpose.msra.mxu0 %v2127
        %2176 = vmatpush.xpose.msra.mxu0 %v2126
        %2177 = vmatpush.xpose.msra.mxu0 %v2125
        %2178 = vmatpush.xpose.msra.mxu0 %v2124
        %2179 = vmatpush.xpose.msra.mxu0 %v2123
        %2180 = vmatpush.xpose.msra.mxu0 %v2122
        %2181 = vmatmul.f32.gmra.mxu0 %v2105
        %v2182 = vpop.f32.mrf.mxu0
        %v2183 = vadd.f32 %v2144, %v2182
        %2184 = vdwg.mxu0
        %v2187 = vrot.slane %v2183, 7
        %vm2188 = vcmask 1040384
        %v2189 = vsel %vm2188, %v2163, %v2187
        %v2191 = vlaneseq
        %vm2192 = vcmp.ge.s32.totalorder %v2191, 0
        %vm2193 = vcmp.lt.s32.totalorder %v2191, 256
        %vm2194 = vmand %vm2192, %vm2193
        %2195 = vst.msk [vmem:[%s220] sm:$0x3] %vm2194, %v2189
        %s2196 = sand.u32 %s139, 1
        %s2197 = scalar_lea.sflag [#allocation5], %s2196
        %s2198 = sand.u32 %s139, 1
        %s2199 = smul.addr %s2198, 2
        %s2200 = scalar_lea.vmem [#allocation4], %s2199
        // Predicated region
        $region41: #{tpu_custom_call.1} parent=39 // pred_check
          %p2201 = pneg %p149
        $region42: #{tpu_custom_call.1} parent=39 // pred_check_branch
          %2203 = sbr.rel (%p2201) target = $region44
        $region43: #{tpu_custom_call.1} parent=39 // pred_region
          %s2204 = smul.u32 2, %s21
          %2206 = vsyncadd %s2197, 0
          %s2207 = scalar_lea.hbm %s5, %s2204
          %s2209 = sshll.u32 %s2200, 4
          %s2210 = int_to_ptr.vmem [resolvable:$true] %s2209
          %s2211 = sshll.u32 %s2207, 4
          %s2212 = int_to_ptr.hbm [resolvable:$true] %s2211
          %2214 = dma.vmem_to_hbm [thread:$0]  %s2210, 32, %s2212, %s2197
        $region44: #{tpu_custom_call.1} parent=39 // pred_fallthru
          _
      $region40: #{tpu_custom_call.1} parent=5 // pred_fallthru
        _
      %p2215 = scmp.le.s32.totalorder 2, %s16
      // Predicated region
      $region45: #{tpu_custom_call.1} parent=5 // pred_check
        %p2216 = pneg %p2215
      $region46: #{tpu_custom_call.1} parent=5 // pred_check_branch
        %2218 = sbr.rel (%p2216) target = $region48
      $region47: #{tpu_custom_call.1} parent=5 // pred_region
        %s2219 = ssub.s32 %s16, 2
        // Predicated region
        $region49: #{tpu_custom_call.1} parent=47 // pred_check
          %p2220 = pneg %p155
        $region50: #{tpu_custom_call.1} parent=47 // pred_check_branch
          %2222 = sbr.rel (%p2220) target = $region52
        $region51: #{tpu_custom_call.1} parent=47 // pred_region
          %s2223 = sand.u32 %s140, 1
          %s2224 = scalar_lea.sflag [#allocation5], %s2223
          %s2225 = sand.u32 %s140, 1
          %s2226 = smul.addr %s2225, 2
          %s2227 = scalar_lea.vmem [#allocation4], %s2226
          %2229 = dma.done %s2224, 32
        $region52: #{tpu_custom_call.1} parent=47 // pred_fallthru
          _
      $region48: #{tpu_custom_call.1} parent=5 // pred_fallthru
        _
    $region6: #{tpu_custom_call.1} parent=1 // loop_footer
      %s20 = sadd.s32 1, %s16
    $region7: #{tpu_custom_call.1} parent=1 // loop_footer_branch
      %15 = sbr.rel target = $region3
    $region8: #{tpu_custom_call.1} parent=1 // loop_exit
      _
    %2230 = vsyncpa [#allocation5], 1
    %s2231 = scalar_lea.sflag [#allocation5], 1
    %2232 = vsyncpa %s2231, 1

</llo_original>
